<compile_context>
chip_gen: v7x
topology: tpu7x:2x2x1
jax: 0.10.0
libtpu: 0.0.40
codegen_flags: <defaults>
</compile_context>

<pallas_src>
import jax
import jax.numpy as jnp
import numpy as np
from jax import lax
from jax.experimental import pallas as pl
from jax.experimental.pallas import tpu as pltpu


# ----------------------------- fused kernel ---------------------------------

def _make_fused_gat_kernel(metas):
    """Builds a kernel that runs every GAT layer back-to-back in VMEM."""
    f32 = jnp.float32

    def kernel(*refs):
        out_ref = refs[-1]
        src_oh = refs[0][...].astype(f32)        # [E, N]  (bf16 in HBM)
        trg_oh = refs[1][...].astype(f32)        # [E, N]
        feats = refs[2][...].astype(f32)         # [N, F_in0]

        idx = 3
        for meta in metas:
            H, HF = meta["H"], meta["HF"]
            w_big = refs[idx][...]               # [F_in, 2*HF + 2*H]
            e_mat = refs[idx + 1][...]           # [H, HF]
            bias = refs[idx + 2][...]            # [1, d_out]
            idx += 3
            if not meta["concat"]:
                m_out = refs[idx][...]           # [HF, F_out]  (head mean)
                idx += 1

            # single node-side matmul: [proj | s_src | s_trg | skip]
            y = jnp.dot(feats, w_big, preferred_element_type=f32)
            s_trg = y[:, HF + H:HF + 2 * H]      # [N, H]
            skip = y[:, HF + 2 * H:]             # [N, HF]

            # lift proj and s_src to edges in ONE matmul with the src one-hot
            lifted = jnp.dot(src_oh, y[:, :HF + H], preferred_element_type=f32)
            proj_l = lifted[:, :HF]              # [E, HF]
            s_src_l = lifted[:, HF:]             # [E, H]
            s_trg_l = jnp.dot(trg_oh, s_trg, preferred_element_type=f32)

            e = s_src_l + s_trg_l
            e = jnp.where(e >= 0, e, 0.2 * e)    # LeakyReLU(0.2)
            e = e - jnp.max(e)                   # global max (as in reference)
            exp_e = jnp.exp(e)                   # [E, H]

            # neighborhood softmax denominator: scatter-add per target node
            # (contract over edge axis of trg_oh — no transposed input needed)
            neigh_sum = lax.dot_general(
                trg_oh, exp_e, (((0,), (0,)), ((), ())),
                preferred_element_type=f32)      # [N, H]
            denom = jnp.dot(trg_oh, neigh_sum, preferred_element_type=f32)
            attn = exp_e * pl.reciprocal(denom + 1e-16, approx=True)

            # broadcast attention across each head's feature block -> [E, HF]
            attn_full = jnp.dot(attn, e_mat, preferred_element_type=f32)
            weighted = proj_l * attn_full

            # aggregate messages per target node (scatter-add via dot_general)
            agg = lax.dot_general(
                trg_oh, weighted, (((0,), (0,)), ((), ())),
                preferred_element_type=f32)      # [N, HF]

            out = agg + skip
            if not meta["concat"]:
                out = jnp.dot(out, m_out, preferred_element_type=f32)
            out = out + bias
            if meta["apply_elu"]:
                out = jnp.where(out > 0, out, jnp.exp(out) - 1.0)  # ELU(1)
            feats = out

        out_ref[...] = feats.astype(out_ref.dtype)

    return kernel


# ------------------------- host-side operand folding ------------------------

def _build_layer_operands(p):
    f32 = jnp.float32
    H, F_out = p["scoring_src"].shape
    HF = H * F_out
    F_in = p["w_proj"].shape[0]

    eye_h = jnp.eye(H, dtype=f32)
    # M_src[h*F_out+f, h'] = scoring_src[h, f] * delta(h, h')
    m_src = (p["scoring_src"][:, :, None] * eye_h[:, None, :]).reshape(HF, H)
    m_trg = (p["scoring_trg"][:, :, None] * eye_h[:, None, :]).reshape(HF, H)
    # fold the per-head score reduction into the projection weight
    w_ssrc = p["w_proj"] @ m_src                  # [F_in, H]
    w_strg = p["w_proj"] @ m_trg                  # [F_in, H]

    if F_out == F_in:
        # out[n, h, :] += x[n, :]  ==  x @ tile(I_Fin, H)
        w_skip_eff = jnp.tile(jnp.eye(F_in, dtype=f32), (1, H))
    else:
        w_skip_eff = p["w_skip"]

    # columns: [proj (HF) | s_src (H) | s_trg (H) | skip (HF)]
    w_big = jnp.concatenate([p["w_proj"], w_ssrc, w_strg, w_skip_eff], axis=1)

    e_mat = jnp.repeat(eye_h, F_out, axis=1)      # [H, HF]
    d_out = HF if p["concat"] else F_out
    bias2d = p["bias"].reshape(1, d_out).astype(f32)

    ops = [w_big.astype(f32), e_mat, bias2d]
    if not p["concat"]:
        ops.append(jnp.tile(jnp.eye(F_out, dtype=f32), (H, 1)) / H)  # head mean

    meta = dict(H=H, F_out=F_out, HF=HF, d_out=d_out,
                concat=p["concat"], apply_elu=p["apply_elu"])
    return ops, meta


def gat_forward(x, src_idx, trg_idx, layers):
    """Full GAT forward as a single pallas_call."""
    f32 = jnp.float32
    N = x.shape[0]

    # one-hot lift/scatter matrices, built once, bf16 (0/1 exact)
    src_oh = jax.nn.one_hot(src_idx, N, dtype=jnp.bfloat16)   # [E, N]
    trg_oh = jax.nn.one_hot(trg_idx, N, dtype=jnp.bfloat16)   # [E, N]

    operands = [src_oh, trg_oh, x.astype(f32)]
    metas = []
    for p in layers:
        ops, meta = _build_layer_operands(p)
        operands += ops
        metas.append(meta)

    kernel = _make_fused_gat_kernel(metas)
    vmem = pl.BlockSpec(memory_space=pltpu.MemorySpace.VMEM)
    d_out = metas[-1]["d_out"]
    return pl.pallas_call(
        kernel,
        out_shape=jax.ShapeDtypeStruct((N, d_out), f32),
        in_specs=[vmem] * len(operands),
        out_specs=vmem,
    )(*operands)


# ---------------- pure-JAX reference (for correctness check) ----------------

def gat_layer_ref(x, src_idx, trg_idx, p):
    N = x.shape[0]
    H, F_out = p["scoring_src"].shape
    proj = (x @ p["w_proj"]).reshape(N, H, F_out)
    s_src = (proj * p["scoring_src"][None]).sum(-1)
    s_trg = (proj * p["scoring_trg"][None]).sum(-1)
    e = jax.nn.leaky_relu(s_src[src_idx] + s_trg[trg_idx], negative_slope=0.2)
    e = e - e.max()
    exp_e = jnp.exp(e)
    denom = jax.ops.segment_sum(exp_e, trg_idx, num_segments=N)[trg_idx]
    attn = exp_e / (denom + 1e-16)
    weighted = proj[src_idx] * attn[..., None]
    out = jax.ops.segment_sum(weighted, trg_idx, num_segments=N)
    if F_out == x.shape[1]:
        out = out + x[:, None, :]
    else:
        out = out + (x @ p["w_skip"]).reshape(N, H, F_out)
    if p["concat"]:
        out = out.reshape(N, H * F_out) + p["bias"]
        out = jax.nn.elu(out)
    else:
        out = out.mean(axis=1) + p["bias"]
    return out


def gat_forward_ref(x, src_idx, trg_idx, layers):
    feats = x
    for p in layers:
        feats = gat_layer_ref(feats, src_idx, trg_idx, p)
    return feats


# ---------------- deterministic parameter init ----------------

def init_gat_params(key, num_of_layers, num_heads_per_layer,
                    num_features_per_layer):
    def xavier(k, shape, fan_in, fan_out):
        bound = (6.0 / (fan_in + fan_out)) ** 0.5
        return jax.random.uniform(k, shape, jnp.float32, -bound, bound)

    heads = [1] + list(num_heads_per_layer)
    layers = []
    for i in range(num_of_layers):
        f_in = num_features_per_layer[i] * heads[i]
        f_out = num_features_per_layer[i + 1]
        h = heads[i + 1]
        concat = i < num_of_layers - 1
        key, k1, k2, k3, k4 = jax.random.split(key, 5)
        layers.append(dict(
            w_proj=xavier(k1, (f_in, h * f_out), f_in, h * f_out),
            w_skip=xavier(k2, (f_in, h * f_out), f_in, h * f_out),
            scoring_src=xavier(k3, (h, f_out), h * f_out, f_out),
            scoring_trg=xavier(k4, (h, f_out), h * f_out, f_out),
            bias=jnp.zeros((h * f_out,) if concat else (f_out,), jnp.float32),
            concat=concat,
            apply_elu=concat,   # ELU on all but last layer (matches GAT ctor)
        ))
    return layers


if __name__ == "__main__":
    key = jax.random.PRNGKey(0)

    # GAT(num_of_layers=3, num_heads_per_layer=[2,2,2],
    #     num_features_per_layer=[8,8,16,12])
    num_of_layers = 3
    num_heads_per_layer = [2, 2, 2]
    num_features_per_layer = [8, 8, 16, 12]
    N, E = 12, 40

    key, kx, ks, kt, kp = jax.random.split(key, 5)
    x = jax.random.normal(kx, (N, num_features_per_layer[0]), jnp.float32)
    src_idx = jax.random.randint(ks, (E,), 0, N)
    trg_idx = jax.random.randint(kt, (E,), 0, N)

    layers = init_gat_params(kp, num_of_layers, num_heads_per_layer,
                             num_features_per_layer)

    out = gat_forward(x, src_idx, trg_idx, layers)
    out = jax.block_until_ready(out)

    ref = gat_forward_ref(x, src_idx, trg_idx, layers)
    np.testing.assert_allclose(np.asarray(out), np.asarray(ref),
                               rtol=2e-2, atol=2e-2)

    print("KERNEL_OK")
</pallas_src>

<mosaic_0001>
module attributes {stable_mosaic.version = 11 : i64} {
  func.func @kernel(%arg0: memref<40x12xbf16, #tpu.memory_space<vmem>>, %arg1: memref<40x12xbf16, #tpu.memory_space<vmem>>, %arg2: memref<12x8xf32, #tpu.memory_space<vmem>>, %arg3: memref<8x36xf32, #tpu.memory_space<vmem>>, %arg4: memref<2x16xf32, #tpu.memory_space<vmem>>, %arg5: memref<1x16xf32, #tpu.memory_space<vmem>>, %arg6: memref<16x68xf32, #tpu.memory_space<vmem>>, %arg7: memref<2x32xf32, #tpu.memory_space<vmem>>, %arg8: memref<1x32xf32, #tpu.memory_space<vmem>>, %arg9: memref<32x52xf32, #tpu.memory_space<vmem>>, %arg10: memref<2x24xf32, #tpu.memory_space<vmem>>, %arg11: memref<1x12xf32, #tpu.memory_space<vmem>>, %arg12: memref<24x12xf32, #tpu.memory_space<vmem>>, %arg13: memref<12x12xf32, #tpu.memory_space<vmem>>) attributes {dimension_semantics = [], scalar_prefetch = 0 : i64, scratch_operands = 0 : i64, tpu.core_type = #tpu.core_type<tc>} {
    %c0 = arith.constant 0 : index
    %c0_0 = arith.constant 0 : index
    %0 = vector.load %arg0[%c0, %c0_0] : memref<40x12xbf16, #tpu.memory_space<vmem>>, vector<40x12xbf16>
    %1 = arith.extf %0 : vector<40x12xbf16> to vector<40x12xf32>
    %c0_1 = arith.constant 0 : index
    %c0_2 = arith.constant 0 : index
    %2 = vector.load %arg1[%c0_1, %c0_2] : memref<40x12xbf16, #tpu.memory_space<vmem>>, vector<40x12xbf16>
    %3 = arith.extf %2 : vector<40x12xbf16> to vector<40x12xf32>
    %c0_3 = arith.constant 0 : index
    %c0_4 = arith.constant 0 : index
    %4 = vector.load %arg2[%c0_3, %c0_4] : memref<12x8xf32, #tpu.memory_space<vmem>>, vector<12x8xf32>
    %c0_5 = arith.constant 0 : index
    %c0_6 = arith.constant 0 : index
    %5 = vector.load %arg3[%c0_5, %c0_6] : memref<8x36xf32, #tpu.memory_space<vmem>>, vector<8x36xf32>
    %c0_7 = arith.constant 0 : index
    %c0_8 = arith.constant 0 : index
    %6 = vector.load %arg4[%c0_7, %c0_8] : memref<2x16xf32, #tpu.memory_space<vmem>>, vector<2x16xf32>
    %c0_9 = arith.constant 0 : index
    %c0_10 = arith.constant 0 : index
    %7 = vector.load %arg5[%c0_9, %c0_10] : memref<1x16xf32, #tpu.memory_space<vmem>>, vector<1x16xf32>
    %cst = arith.constant dense<0.000000e+00> : vector<12x36xf32>
    %8 = tpu.matmul %4, %5, %cst {dimension_numbers = #tpu.dot_dimension_numbers<[1], [0], [0], [1], [0, 0, 1, 1], [], []>} : vector<12x8xf32>, vector<8x36xf32>, vector<12x36xf32> -> vector<12x36xf32>
    %9 = vector.extract_strided_slice %8 {offsets = [0, 18], sizes = [12, 2], strides = [1, 1]} : vector<12x36xf32> to vector<12x2xf32>
    %10 = vector.extract_strided_slice %8 {offsets = [0, 20], sizes = [12, 16], strides = [1, 1]} : vector<12x36xf32> to vector<12x16xf32>
    %11 = vector.extract_strided_slice %8 {offsets = [0, 0], sizes = [12, 18], strides = [1, 1]} : vector<12x36xf32> to vector<12x18xf32>
    %cst_11 = arith.constant dense<0.000000e+00> : vector<40x18xf32>
    %12 = tpu.matmul %1, %11, %cst_11 {dimension_numbers = #tpu.dot_dimension_numbers<[1], [0], [0], [1], [0, 0, 1, 1], [], []>} : vector<40x12xf32>, vector<12x18xf32>, vector<40x18xf32> -> vector<40x18xf32>
    %13 = vector.extract_strided_slice %12 {offsets = [0, 0], sizes = [40, 16], strides = [1, 1]} : vector<40x18xf32> to vector<40x16xf32>
    %14 = vector.extract_strided_slice %12 {offsets = [0, 16], sizes = [40, 2], strides = [1, 1]} : vector<40x18xf32> to vector<40x2xf32>
    %cst_12 = arith.constant dense<0.000000e+00> : vector<40x2xf32>
    %15 = tpu.matmul %3, %9, %cst_12 {dimension_numbers = #tpu.dot_dimension_numbers<[1], [0], [0], [1], [0, 0, 1, 1], [], []>} : vector<40x12xf32>, vector<12x2xf32>, vector<40x2xf32> -> vector<40x2xf32>
    %16 = arith.addf %14, %15 : vector<40x2xf32>
    %cst_13 = arith.constant 0.000000e+00 : f32
    %17 = vector.broadcast %cst_13 : f32 to vector<40x2xf32>
    %18 = arith.cmpf oge, %16, %17 : vector<40x2xf32>
    %cst_14 = arith.constant 2.000000e-01 : f32
    %19 = vector.broadcast %cst_14 : f32 to vector<40x2xf32>
    %20 = arith.mulf %19, %16 : vector<40x2xf32>
    %21 = arith.select %18, %16, %20 : vector<40x2xi1>, vector<40x2xf32>
    %22 = vector.shape_cast %21 : vector<40x2xf32> to vector<1x40x2xf32>
    %cst_15 = arith.constant dense<0xFF800000> : vector<1xf32>
    %23 = vector.multi_reduction <maximumf>, %22, %cst_15 [1, 2] : vector<1x40x2xf32> to vector<1xf32>
    %24 = vector.shape_cast %23 : vector<1xf32> to vector<1x1x1xf32>
    %25 = vector.extract %24[0, 0, 0] : f32 from vector<1x1x1xf32>
    %26 = vector.broadcast %25 : f32 to vector<40x2xf32>
    %27 = arith.subf %21, %26 : vector<40x2xf32>
    %28 = math.exp %27 : vector<40x2xf32>
    %cst_16 = arith.constant dense<0.000000e+00> : vector<12x2xf32>
    %29 = tpu.matmul %3, %28, %cst_16 {dimension_numbers = #tpu.dot_dimension_numbers<[0], [0], [1], [1], [0, 1, 1, 1], [], []>} : vector<40x12xf32>, vector<40x2xf32>, vector<12x2xf32> -> vector<12x2xf32>
    %cst_17 = arith.constant dense<0.000000e+00> : vector<40x2xf32>
    %30 = tpu.matmul %3, %29, %cst_17 {dimension_numbers = #tpu.dot_dimension_numbers<[1], [0], [0], [1], [0, 0, 1, 1], [], []>} : vector<40x12xf32>, vector<12x2xf32>, vector<40x2xf32> -> vector<40x2xf32>
    %cst_18 = arith.constant 1.000000e-16 : f32
    %31 = vector.broadcast %cst_18 : f32 to vector<40x2xf32>
    %32 = arith.addf %30, %31 : vector<40x2xf32>
    %33 = tpu.reciprocal %32 {approx = true} : vector<40x2xf32> -> vector<40x2xf32>
    %34 = arith.mulf %28, %33 : vector<40x2xf32>
    %cst_19 = arith.constant dense<0.000000e+00> : vector<40x16xf32>
    %35 = tpu.matmul %34, %6, %cst_19 {dimension_numbers = #tpu.dot_dimension_numbers<[1], [0], [0], [1], [0, 0, 1, 1], [], []>} : vector<40x2xf32>, vector<2x16xf32>, vector<40x16xf32> -> vector<40x16xf32>
    %36 = arith.mulf %13, %35 : vector<40x16xf32>
    %cst_20 = arith.constant dense<0.000000e+00> : vector<12x16xf32>
    %37 = tpu.matmul %3, %36, %cst_20 {dimension_numbers = #tpu.dot_dimension_numbers<[0], [0], [1], [1], [0, 1, 1, 1], [], []>} : vector<40x12xf32>, vector<40x16xf32>, vector<12x16xf32> -> vector<12x16xf32>
    %38 = arith.addf %37, %10 : vector<12x16xf32>
    %39 = vector.broadcast %7 : vector<1x16xf32> to vector<12x16xf32>
    %40 = arith.addf %38, %39 : vector<12x16xf32>
    %cst_21 = arith.constant 0.000000e+00 : f32
    %41 = vector.broadcast %cst_21 : f32 to vector<12x16xf32>
    %42 = arith.cmpf ogt, %40, %41 : vector<12x16xf32>
    %43 = math.exp %40 : vector<12x16xf32>
    %cst_22 = arith.constant 1.000000e+00 : f32
    %44 = vector.broadcast %cst_22 : f32 to vector<12x16xf32>
    %45 = arith.subf %43, %44 : vector<12x16xf32>
    %46 = arith.select %42, %40, %45 : vector<12x16xi1>, vector<12x16xf32>
    %c0_23 = arith.constant 0 : index
    %c0_24 = arith.constant 0 : index
    %47 = vector.load %arg6[%c0_23, %c0_24] : memref<16x68xf32, #tpu.memory_space<vmem>>, vector<16x68xf32>
    %c0_25 = arith.constant 0 : index
    %c0_26 = arith.constant 0 : index
    %48 = vector.load %arg7[%c0_25, %c0_26] : memref<2x32xf32, #tpu.memory_space<vmem>>, vector<2x32xf32>
    %c0_27 = arith.constant 0 : index
    %c0_28 = arith.constant 0 : index
    %49 = vector.load %arg8[%c0_27, %c0_28] : memref<1x32xf32, #tpu.memory_space<vmem>>, vector<1x32xf32>
    %cst_29 = arith.constant dense<0.000000e+00> : vector<12x68xf32>
    %50 = tpu.matmul %46, %47, %cst_29 {dimension_numbers = #tpu.dot_dimension_numbers<[1], [0], [0], [1], [0, 0, 1, 1], [], []>} : vector<12x16xf32>, vector<16x68xf32>, vector<12x68xf32> -> vector<12x68xf32>
    %51 = vector.extract_strided_slice %50 {offsets = [0, 34], sizes = [12, 2], strides = [1, 1]} : vector<12x68xf32> to vector<12x2xf32>
    %52 = vector.extract_strided_slice %50 {offsets = [0, 36], sizes = [12, 32], strides = [1, 1]} : vector<12x68xf32> to vector<12x32xf32>
    %53 = vector.extract_strided_slice %50 {offsets = [0, 0], sizes = [12, 34], strides = [1, 1]} : vector<12x68xf32> to vector<12x34xf32>
    %cst_30 = arith.constant dense<0.000000e+00> : vector<40x34xf32>
    %54 = tpu.matmul %1, %53, %cst_30 {dimension_numbers = #tpu.dot_dimension_numbers<[1], [0], [0], [1], [0, 0, 1, 1], [], []>} : vector<40x12xf32>, vector<12x34xf32>, vector<40x34xf32> -> vector<40x34xf32>
    %55 = vector.extract_strided_slice %54 {offsets = [0, 0], sizes = [40, 32], strides = [1, 1]} : vector<40x34xf32> to vector<40x32xf32>
    %56 = vector.extract_strided_slice %54 {offsets = [0, 32], sizes = [40, 2], strides = [1, 1]} : vector<40x34xf32> to vector<40x2xf32>
    %cst_31 = arith.constant dense<0.000000e+00> : vector<40x2xf32>
    %57 = tpu.matmul %3, %51, %cst_31 {dimension_numbers = #tpu.dot_dimension_numbers<[1], [0], [0], [1], [0, 0, 1, 1], [], []>} : vector<40x12xf32>, vector<12x2xf32>, vector<40x2xf32> -> vector<40x2xf32>
    %58 = arith.addf %56, %57 : vector<40x2xf32>
    %cst_32 = arith.constant 0.000000e+00 : f32
    %59 = vector.broadcast %cst_32 : f32 to vector<40x2xf32>
    %60 = arith.cmpf oge, %58, %59 : vector<40x2xf32>
    %cst_33 = arith.constant 2.000000e-01 : f32
    %61 = vector.broadcast %cst_33 : f32 to vector<40x2xf32>
    %62 = arith.mulf %61, %58 : vector<40x2xf32>
    %63 = arith.select %60, %58, %62 : vector<40x2xi1>, vector<40x2xf32>
    %64 = vector.shape_cast %63 : vector<40x2xf32> to vector<1x40x2xf32>
    %cst_34 = arith.constant dense<0xFF800000> : vector<1xf32>
    %65 = vector.multi_reduction <maximumf>, %64, %cst_34 [1, 2] : vector<1x40x2xf32> to vector<1xf32>
    %66 = vector.shape_cast %65 : vector<1xf32> to vector<1x1x1xf32>
    %67 = vector.extract %66[0, 0, 0] : f32 from vector<1x1x1xf32>
    %68 = vector.broadcast %67 : f32 to vector<40x2xf32>
    %69 = arith.subf %63, %68 : vector<40x2xf32>
    %70 = math.exp %69 : vector<40x2xf32>
    %cst_35 = arith.constant dense<0.000000e+00> : vector<12x2xf32>
    %71 = tpu.matmul %3, %70, %cst_35 {dimension_numbers = #tpu.dot_dimension_numbers<[0], [0], [1], [1], [0, 1, 1, 1], [], []>} : vector<40x12xf32>, vector<40x2xf32>, vector<12x2xf32> -> vector<12x2xf32>
    %cst_36 = arith.constant dense<0.000000e+00> : vector<40x2xf32>
    %72 = tpu.matmul %3, %71, %cst_36 {dimension_numbers = #tpu.dot_dimension_numbers<[1], [0], [0], [1], [0, 0, 1, 1], [], []>} : vector<40x12xf32>, vector<12x2xf32>, vector<40x2xf32> -> vector<40x2xf32>
    %cst_37 = arith.constant 1.000000e-16 : f32
    %73 = vector.broadcast %cst_37 : f32 to vector<40x2xf32>
    %74 = arith.addf %72, %73 : vector<40x2xf32>
    %75 = tpu.reciprocal %74 {approx = true} : vector<40x2xf32> -> vector<40x2xf32>
    %76 = arith.mulf %70, %75 : vector<40x2xf32>
    %cst_38 = arith.constant dense<0.000000e+00> : vector<40x32xf32>
    %77 = tpu.matmul %76, %48, %cst_38 {dimension_numbers = #tpu.dot_dimension_numbers<[1], [0], [0], [1], [0, 0, 1, 1], [], []>} : vector<40x2xf32>, vector<2x32xf32>, vector<40x32xf32> -> vector<40x32xf32>
    %78 = arith.mulf %55, %77 : vector<40x32xf32>
    %cst_39 = arith.constant dense<0.000000e+00> : vector<12x32xf32>
    %79 = tpu.matmul %3, %78, %cst_39 {dimension_numbers = #tpu.dot_dimension_numbers<[0], [0], [1], [1], [0, 1, 1, 1], [], []>} : vector<40x12xf32>, vector<40x32xf32>, vector<12x32xf32> -> vector<12x32xf32>
    %80 = arith.addf %79, %52 : vector<12x32xf32>
    %81 = vector.broadcast %49 : vector<1x32xf32> to vector<12x32xf32>
    %82 = arith.addf %80, %81 : vector<12x32xf32>
    %cst_40 = arith.constant 0.000000e+00 : f32
    %83 = vector.broadcast %cst_40 : f32 to vector<12x32xf32>
    %84 = arith.cmpf ogt, %82, %83 : vector<12x32xf32>
    %85 = math.exp %82 : vector<12x32xf32>
    %cst_41 = arith.constant 1.000000e+00 : f32
    %86 = vector.broadcast %cst_41 : f32 to vector<12x32xf32>
    %87 = arith.subf %85, %86 : vector<12x32xf32>
    %88 = arith.select %84, %82, %87 : vector<12x32xi1>, vector<12x32xf32>
    %c0_42 = arith.constant 0 : index
    %c0_43 = arith.constant 0 : index
    %89 = vector.load %arg9[%c0_42, %c0_43] : memref<32x52xf32, #tpu.memory_space<vmem>>, vector<32x52xf32>
    %c0_44 = arith.constant 0 : index
    %c0_45 = arith.constant 0 : index
    %90 = vector.load %arg10[%c0_44, %c0_45] : memref<2x24xf32, #tpu.memory_space<vmem>>, vector<2x24xf32>
    %c0_46 = arith.constant 0 : index
    %c0_47 = arith.constant 0 : index
    %91 = vector.load %arg11[%c0_46, %c0_47] : memref<1x12xf32, #tpu.memory_space<vmem>>, vector<1x12xf32>
    %c0_48 = arith.constant 0 : index
    %c0_49 = arith.constant 0 : index
    %92 = vector.load %arg12[%c0_48, %c0_49] : memref<24x12xf32, #tpu.memory_space<vmem>>, vector<24x12xf32>
    %cst_50 = arith.constant dense<0.000000e+00> : vector<12x52xf32>
    %93 = tpu.matmul %88, %89, %cst_50 {dimension_numbers = #tpu.dot_dimension_numbers<[1], [0], [0], [1], [0, 0, 1, 1], [], []>} : vector<12x32xf32>, vector<32x52xf32>, vector<12x52xf32> -> vector<12x52xf32>
    %94 = vector.extract_strided_slice %93 {offsets = [0, 26], sizes = [12, 2], strides = [1, 1]} : vector<12x52xf32> to vector<12x2xf32>
    %95 = vector.extract_strided_slice %93 {offsets = [0, 28], sizes = [12, 24], strides = [1, 1]} : vector<12x52xf32> to vector<12x24xf32>
    %96 = vector.extract_strided_slice %93 {offsets = [0, 0], sizes = [12, 26], strides = [1, 1]} : vector<12x52xf32> to vector<12x26xf32>
    %cst_51 = arith.constant dense<0.000000e+00> : vector<40x26xf32>
    %97 = tpu.matmul %1, %96, %cst_51 {dimension_numbers = #tpu.dot_dimension_numbers<[1], [0], [0], [1], [0, 0, 1, 1], [], []>} : vector<40x12xf32>, vector<12x26xf32>, vector<40x26xf32> -> vector<40x26xf32>
    %98 = vector.extract_strided_slice %97 {offsets = [0, 0], sizes = [40, 24], strides = [1, 1]} : vector<40x26xf32> to vector<40x24xf32>
    %99 = vector.extract_strided_slice %97 {offsets = [0, 24], sizes = [40, 2], strides = [1, 1]} : vector<40x26xf32> to vector<40x2xf32>
    %cst_52 = arith.constant dense<0.000000e+00> : vector<40x2xf32>
    %100 = tpu.matmul %3, %94, %cst_52 {dimension_numbers = #tpu.dot_dimension_numbers<[1], [0], [0], [1], [0, 0, 1, 1], [], []>} : vector<40x12xf32>, vector<12x2xf32>, vector<40x2xf32> -> vector<40x2xf32>
    %101 = arith.addf %99, %100 : vector<40x2xf32>
    %cst_53 = arith.constant 0.000000e+00 : f32
    %102 = vector.broadcast %cst_53 : f32 to vector<40x2xf32>
    %103 = arith.cmpf oge, %101, %102 : vector<40x2xf32>
    %cst_54 = arith.constant 2.000000e-01 : f32
    %104 = vector.broadcast %cst_54 : f32 to vector<40x2xf32>
    %105 = arith.mulf %104, %101 : vector<40x2xf32>
    %106 = arith.select %103, %101, %105 : vector<40x2xi1>, vector<40x2xf32>
    %107 = vector.shape_cast %106 : vector<40x2xf32> to vector<1x40x2xf32>
    %cst_55 = arith.constant dense<0xFF800000> : vector<1xf32>
    %108 = vector.multi_reduction <maximumf>, %107, %cst_55 [1, 2] : vector<1x40x2xf32> to vector<1xf32>
    %109 = vector.shape_cast %108 : vector<1xf32> to vector<1x1x1xf32>
    %110 = vector.extract %109[0, 0, 0] : f32 from vector<1x1x1xf32>
    %111 = vector.broadcast %110 : f32 to vector<40x2xf32>
    %112 = arith.subf %106, %111 : vector<40x2xf32>
    %113 = math.exp %112 : vector<40x2xf32>
    %cst_56 = arith.constant dense<0.000000e+00> : vector<12x2xf32>
    %114 = tpu.matmul %3, %113, %cst_56 {dimension_numbers = #tpu.dot_dimension_numbers<[0], [0], [1], [1], [0, 1, 1, 1], [], []>} : vector<40x12xf32>, vector<40x2xf32>, vector<12x2xf32> -> vector<12x2xf32>
    %cst_57 = arith.constant dense<0.000000e+00> : vector<40x2xf32>
    %115 = tpu.matmul %3, %114, %cst_57 {dimension_numbers = #tpu.dot_dimension_numbers<[1], [0], [0], [1], [0, 0, 1, 1], [], []>} : vector<40x12xf32>, vector<12x2xf32>, vector<40x2xf32> -> vector<40x2xf32>
    %cst_58 = arith.constant 1.000000e-16 : f32
    %116 = vector.broadcast %cst_58 : f32 to vector<40x2xf32>
    %117 = arith.addf %115, %116 : vector<40x2xf32>
    %118 = tpu.reciprocal %117 {approx = true} : vector<40x2xf32> -> vector<40x2xf32>
    %119 = arith.mulf %113, %118 : vector<40x2xf32>
    %cst_59 = arith.constant dense<0.000000e+00> : vector<40x24xf32>
    %120 = tpu.matmul %119, %90, %cst_59 {dimension_numbers = #tpu.dot_dimension_numbers<[1], [0], [0], [1], [0, 0, 1, 1], [], []>} : vector<40x2xf32>, vector<2x24xf32>, vector<40x24xf32> -> vector<40x24xf32>
    %121 = arith.mulf %98, %120 : vector<40x24xf32>
    %cst_60 = arith.constant dense<0.000000e+00> : vector<12x24xf32>
    %122 = tpu.matmul %3, %121, %cst_60 {dimension_numbers = #tpu.dot_dimension_numbers<[0], [0], [1], [1], [0, 1, 1, 1], [], []>} : vector<40x12xf32>, vector<40x24xf32>, vector<12x24xf32> -> vector<12x24xf32>
    %123 = arith.addf %122, %95 : vector<12x24xf32>
    %cst_61 = arith.constant dense<0.000000e+00> : vector<12x12xf32>
    %124 = tpu.matmul %123, %92, %cst_61 {dimension_numbers = #tpu.dot_dimension_numbers<[1], [0], [0], [1], [0, 0, 1, 1], [], []>} : vector<12x24xf32>, vector<24x12xf32>, vector<12x12xf32> -> vector<12x12xf32>
    %125 = vector.broadcast %91 : vector<1x12xf32> to vector<12x12xf32>
    %126 = arith.addf %124, %125 : vector<12x12xf32>
    %c0_62 = arith.constant 0 : index
    %c0_63 = arith.constant 0 : index
    %127 = vector.load %arg13[%c0_62, %c0_63] : memref<12x12xf32, #tpu.memory_space<vmem>>, vector<12x12xf32>
    tpu.vector_store %arg13[%c0_62, %c0_63], %126 {strides = array<i32>} : memref<12x12xf32, #tpu.memory_space<vmem>>, vector<12x12xf32>,
    return
  }
}

</mosaic_0001>

<llo_original>
// kernel: tpu_custom_call.1
$region0: #{tpu_custom_call.1}
  #allocation0 [shape = 'u32[]', space=smem, size = 0x4, offset = 0x4, fixed_abs, tag = 'smem constant byte address 0x4 - core index']
  #allocation1 [shape = 'u32[144,128]{1,0:T(1,128)}', space=vmem, size = 0x12000, scoped, tag = 'internal scratch']
  %s0 = inlined_call_operand.vmem [shape: bf16[40,12], index: 0, kind: input, shape index: {}]
  %s1 = inlined_call_operand.vmem [shape: bf16[40,12], index: 1, kind: input, shape index: {}]
  %s2 = inlined_call_operand.vmem [shape: f32[12,8], index: 2, kind: input, shape index: {}]
  %s3 = inlined_call_operand.vmem [shape: f32[8,36], index: 3, kind: input, shape index: {}]
  %s4 = inlined_call_operand.vmem [shape: f32[2,16], index: 4, kind: input, shape index: {}]
  %s5 = inlined_call_operand.vmem [shape: f32[1,16], index: 5, kind: input, shape index: {}]
  %s6 = inlined_call_operand.vmem [shape: f32[16,68], index: 6, kind: input, shape index: {}]
  %s7 = inlined_call_operand.vmem [shape: f32[2,32], index: 7, kind: input, shape index: {}]
  %s8 = inlined_call_operand.vmem [shape: f32[1,32], index: 8, kind: input, shape index: {}]
  %s9 = inlined_call_operand.vmem [shape: f32[32,52], index: 9, kind: input, shape index: {}]
  %s10 = inlined_call_operand.vmem [shape: f32[2,24], index: 10, kind: input, shape index: {}]
  %s11 = inlined_call_operand.vmem [shape: f32[1,12], index: 11, kind: input, shape index: {}]
  %s12 = inlined_call_operand.vmem [shape: f32[24,12], index: 12, kind: input, shape index: {}]
  %s13 = inlined_call_operand.hbm [shape: f32[12,12], index: 13, kind: output, shape index: {}]
  %s14 = sld [smem:[#allocation0]]
  $region62: #{tpu_custom_call.1} parent=0
    _
  %s16 = ssub.s32 1, %s14
  %s17 = scalar_select 0, %s16, %s14
  $region1: #{tpu_custom_call.1} parent=0
    #allocation2 [shape = 'u8[8192]{0}', space=vmem, size = 0x2000, scoped, tag = 'output window, operand 0, single buffered']
    #allocation3 [shape = 's32[1]{0}', space=sflag, size = 0x4, scoped, tag = 'scoped memory for tpu_custom_call.1']
    %18 = vsyncpa [#allocation3], 0
    // Predicated region
    $region2: #{tpu_custom_call.1} parent=1 // pred_check
      _
    $region3: #{tpu_custom_call.1} parent=1 // pred_check_branch
      %20 = sbr.rel (0) target = $region5
    $region4: #{tpu_custom_call.1} parent=1 // pred_region
      _
    $region5: #{tpu_custom_call.1} parent=1 // pred_fallthru
      _
    // Predicated region
    $region6: #{tpu_custom_call.1} parent=1 // pred_check
      _
    $region7: #{tpu_custom_call.1} parent=1 // pred_check_branch
      %22 = sbr.rel (0) target = $region9
    $region8: #{tpu_custom_call.1} parent=1 // pred_region
      _
    $region9: #{tpu_custom_call.1} parent=1 // pred_fallthru
      _
    // Predicated region
    $region10: #{tpu_custom_call.1} parent=1 // pred_check
      _
    $region11: #{tpu_custom_call.1} parent=1 // pred_check_branch
      %24 = sbr.rel (0) target = $region13
    $region12: #{tpu_custom_call.1} parent=1 // pred_region
      _
    $region13: #{tpu_custom_call.1} parent=1 // pred_fallthru
      _
    // Predicated region
    $region14: #{tpu_custom_call.1} parent=1 // pred_check
      _
    $region15: #{tpu_custom_call.1} parent=1 // pred_check_branch
      %26 = sbr.rel (0) target = $region17
    $region16: #{tpu_custom_call.1} parent=1 // pred_region
      _
    $region17: #{tpu_custom_call.1} parent=1 // pred_fallthru
      _
    // Predicated region
    $region18: #{tpu_custom_call.1} parent=1 // pred_check
      _
    $region19: #{tpu_custom_call.1} parent=1 // pred_check_branch
      %28 = sbr.rel (0) target = $region21
    $region20: #{tpu_custom_call.1} parent=1 // pred_region
      _
    $region21: #{tpu_custom_call.1} parent=1 // pred_fallthru
      _
    // Predicated region
    $region22: #{tpu_custom_call.1} parent=1 // pred_check
      _
    $region23: #{tpu_custom_call.1} parent=1 // pred_check_branch
      %30 = sbr.rel (0) target = $region25
    $region24: #{tpu_custom_call.1} parent=1 // pred_region
      _
    $region25: #{tpu_custom_call.1} parent=1 // pred_fallthru
      _
    // Predicated region
    $region26: #{tpu_custom_call.1} parent=1 // pred_check
      _
    $region27: #{tpu_custom_call.1} parent=1 // pred_check_branch
      %32 = sbr.rel (0) target = $region29
    $region28: #{tpu_custom_call.1} parent=1 // pred_region
      _
    $region29: #{tpu_custom_call.1} parent=1 // pred_fallthru
      _
    // Predicated region
    $region30: #{tpu_custom_call.1} parent=1 // pred_check
      _
    $region31: #{tpu_custom_call.1} parent=1 // pred_check_branch
      %34 = sbr.rel (0) target = $region33
    $region32: #{tpu_custom_call.1} parent=1 // pred_region
      _
    $region33: #{tpu_custom_call.1} parent=1 // pred_fallthru
      _
    // Predicated region
    $region34: #{tpu_custom_call.1} parent=1 // pred_check
      _
    $region35: #{tpu_custom_call.1} parent=1 // pred_check_branch
      %36 = sbr.rel (0) target = $region37
    $region36: #{tpu_custom_call.1} parent=1 // pred_region
      _
    $region37: #{tpu_custom_call.1} parent=1 // pred_fallthru
      _
    // Predicated region
    $region38: #{tpu_custom_call.1} parent=1 // pred_check
      _
    $region39: #{tpu_custom_call.1} parent=1 // pred_check_branch
      %38 = sbr.rel (0) target = $region41
    $region40: #{tpu_custom_call.1} parent=1 // pred_region
      _
    $region41: #{tpu_custom_call.1} parent=1 // pred_fallthru
      _
    // Predicated region
    $region42: #{tpu_custom_call.1} parent=1 // pred_check
      _
    $region43: #{tpu_custom_call.1} parent=1 // pred_check_branch
      %40 = sbr.rel (0) target = $region45
    $region44: #{tpu_custom_call.1} parent=1 // pred_region
      _
    $region45: #{tpu_custom_call.1} parent=1 // pred_fallthru
      _
    // Predicated region
    $region46: #{tpu_custom_call.1} parent=1 // pred_check
      _
    $region47: #{tpu_custom_call.1} parent=1 // pred_check_branch
      %42 = sbr.rel (0) target = $region49
    $region48: #{tpu_custom_call.1} parent=1 // pred_region
      _
    $region49: #{tpu_custom_call.1} parent=1 // pred_fallthru
      _
    // Predicated region
    $region50: #{tpu_custom_call.1} parent=1 // pred_check
      _
    $region51: #{tpu_custom_call.1} parent=1 // pred_check_branch
      %44 = sbr.rel (0) target = $region53
    $region52: #{tpu_custom_call.1} parent=1 // pred_region
      _
    $region53: #{tpu_custom_call.1} parent=1 // pred_fallthru
      _
    %v45 = vld [vmem:[%s0] sm:$0xf]
    %v46 = vld [vmem:[%s0 + $0x4] sm:$0xf]
    %v47 = vld [vmem:[%s0 + $0x8] sm:$0xf]
    %v48 = vld [vmem:[%s0 + $0xc] sm:$0xf]
    %v49 = vld [vmem:[%s0 + $0x10] sm:$0xf]
    %v50 = vunpack.c.l.bf16 %v45
    %v51 = vunpack.c.l.bf16 %v46
    %v52 = vunpack.c.l.bf16 %v47
    %v53 = vunpack.c.l.bf16 %v48
    %v54 = vunpack.c.l.bf16 %v49
    %v55 = vld [vmem:[%s1] sm:$0xf]
    %v56 = vld [vmem:[%s1 + $0x4] sm:$0xf]
    %v57 = vld [vmem:[%s1 + $0x8] sm:$0xf]
    %v58 = vld [vmem:[%s1 + $0xc] sm:$0xf]
    %v59 = vld [vmem:[%s1 + $0x10] sm:$0xf]
    %v60 = vunpack.c.l.bf16 %v55
    %v61 = vunpack.c.l.bf16 %v56
    %v62 = vunpack.c.l.bf16 %v57
    %v63 = vunpack.c.l.bf16 %v58
    %v64 = vunpack.c.l.bf16 %v59
    %v65 = vld [vmem:[%s2] sm:$0xff]
    %v66 = vld [vmem:[%s2 + $0x8] sm:$0xf]
    %v67 = vld [vmem:[%s3] sm:$0xff]
    %v68 = vld [vmem:[%s4] sm:$0x3]
    %v69 = vld [vmem:[%s5] sm:$0x1]
    %vm70 = vcmask 64512
    %v72 = vsel %vm70, %v65, 0
    %v75 = vsel %vm70, %v66, 0
    %77 = vmatprep.subr.mxu0 0.0
    %78 = vmatpush1.msra.mxu0 %v67
    %79 = vmatprep.subr.mxu0 0.0
    %80 = vmatpush1.msra.mxu0 0.0
    %81 = vmatprep.subr.mxu0 0.0
    %82 = vmatpush1.msra.mxu0 0.0
    %83 = vmatprep.subr.mxu0 0.0
    %84 = vmatpush1.msra.mxu0 0.0
    %85 = vmatprep.subr.mxu0 0.0
    %86 = vmatpush1.msra.mxu0 0.0
    %87 = vmatprep.subr.mxu0 0.0
    %88 = vmatpush1.msra.mxu0 0.0
    %89 = vmatprep.subr.mxu0 0.0
    %90 = vmatpush1.msra.mxu0 0.0
    %91 = vmatprep.subr.mxu0 0.0
    %92 = vmatpush1.msra.mxu0 0.0
    %93 = vmatprep.subr.mxu0 0.0
    %94 = vmatpush1.msra.mxu0 0.0
    %95 = vmatprep.subr.mxu0 0.0
    %96 = vmatpush1.msra.mxu0 0.0
    %97 = vmatprep.subr.mxu0 0.0
    %98 = vmatpush1.msra.mxu0 0.0
    %99 = vmatprep.subr.mxu0 0.0
    %100 = vmatpush1.msra.mxu0 0.0
    %101 = vmatprep.subr.mxu0 0.0
    %102 = vmatpush1.msra.mxu0 0.0
    %103 = vmatprep.subr.mxu0 0.0
    %104 = vmatpush1.msra.mxu0 0.0
    %105 = vmatprep.subr.mxu0 0.0
    %106 = vmatpush1.msra.mxu0 0.0
    %107 = vmatprep.subr.mxu0 0.0
    %108 = vmatpush1.msra.mxu0 0.0
    %109 = vmatprep.subr.mxu0 0.0
    %110 = vmatpush1.msra.mxu0 0.0
    %111 = vmatprep.subr.mxu0 0.0
    %112 = vmatpush1.msra.mxu0 0.0
    %113 = vmatprep.subr.mxu0 0.0
    %114 = vmatpush1.msra.mxu0 0.0
    %115 = vmatprep.subr.mxu0 0.0
    %116 = vmatpush1.msra.mxu0 0.0
    %117 = vmatprep.subr.mxu0 0.0
    %118 = vmatpush1.msra.mxu0 0.0
    %119 = vmatprep.subr.mxu0 0.0
    %120 = vmatpush1.msra.mxu0 0.0
    %121 = vmatprep.subr.mxu0 0.0
    %122 = vmatpush1.msra.mxu0 0.0
    %123 = vmatprep.subr.mxu0 0.0
    %124 = vmatpush1.msra.mxu0 0.0
    %125 = vmatprep.subr.mxu0 0.0
    %126 = vmatpush1.msra.mxu0 0.0
    %127 = vmatprep.subr.mxu0 0.0
    %128 = vmatpush1.msra.mxu0 0.0
    %129 = vmatprep.subr.mxu0 0.0
    %130 = vmatpush1.msra.mxu0 0.0
    %131 = vmatprep.subr.mxu0 0.0
    %132 = vmatpush1.msra.mxu0 0.0
    %133 = vmatprep.subr.mxu0 0.0
    %134 = vmatpush1.msra.mxu0 0.0
    %135 = vmatprep.subr.mxu0 0.0
    %136 = vmatpush1.msra.mxu0 0.0
    %137 = vmatprep.subr.mxu0 0.0
    %138 = vmatpush1.msra.mxu0 0.0
    %139 = vmatprep.subr.mxu0 0.0
    %140 = vmatpush1.msra.mxu0 0.0
    %141 = vmatprep.mubr.f32.mxu0 0.0
    %142 = vmatmul.mubr.f32.gmra.mrb[0].mxu0 %v72
    %v143 = vpop.f32.mrb[0].mxu0
    %v144 = vadd.f32 0.0, %v143
    %v145 = vpop.f32.mrb[0].mxu0
    %146 = vmatprep.mubr.f32.mxu0 0.0
    %147 = vmatmul.mubr.f32.gmra.mrb[0].mxu0 %v75
    %v148 = vpop.f32.mrb[0].mxu0
    %v149 = vadd.f32 0.0, %v148
    %v150 = vpop.f32.mrb[0].mxu0
    %151 = vdwg.mxu0
    %vm152 = vcmask 97280
    %v154 = vsel %vm152, %v50, 0
    %v157 = vsel %vm152, %v51, 0
    %v160 = vsel %vm152, %v52, 0
    %v163 = vsel %vm152, %v53, 0
    %v166 = vsel %vm152, %v54, 0
    %vm168 = vcmask 1043456
    %v170 = vsel %vm168, %v149, 0
    %172 = vmatprep.subr.mxu0 0.0
    %173 = vmatpush1.msra.mxu0 %v144
    %174 = vmatprep.subr.mxu0 0.0
    %175 = vmatpush1.msra.mxu0 %v170
    %176 = vmatprep.subr.mxu0 0.0
    %177 = vmatpush1.msra.mxu0 0.0
    %178 = vmatprep.subr.mxu0 0.0
    %179 = vmatpush1.msra.mxu0 0.0
    %180 = vmatprep.subr.mxu0 0.0
    %181 = vmatpush1.msra.mxu0 0.0
    %182 = vmatprep.subr.mxu0 0.0
    %183 = vmatpush1.msra.mxu0 0.0
    %184 = vmatprep.subr.mxu0 0.0
    %185 = vmatpush1.msra.mxu0 0.0
    %186 = vmatprep.subr.mxu0 0.0
    %187 = vmatpush1.msra.mxu0 0.0
    %188 = vmatprep.subr.mxu0 0.0
    %189 = vmatpush1.msra.mxu0 0.0
    %190 = vmatprep.subr.mxu0 0.0
    %191 = vmatpush1.msra.mxu0 0.0
    %192 = vmatprep.subr.mxu0 0.0
    %193 = vmatpush1.msra.mxu0 0.0
    %194 = vmatprep.subr.mxu0 0.0
    %195 = vmatpush1.msra.mxu0 0.0
    %196 = vmatprep.subr.mxu0 0.0
    %197 = vmatpush1.msra.mxu0 0.0
    %198 = vmatprep.subr.mxu0 0.0
    %199 = vmatpush1.msra.mxu0 0.0
    %200 = vmatprep.subr.mxu0 0.0
    %201 = vmatpush1.msra.mxu0 0.0
    %202 = vmatprep.subr.mxu0 0.0
    %203 = vmatpush1.msra.mxu0 0.0
    %204 = vmatprep.subr.mxu0 0.0
    %205 = vmatpush1.msra.mxu0 0.0
    %206 = vmatprep.subr.mxu0 0.0
    %207 = vmatpush1.msra.mxu0 0.0
    %208 = vmatprep.subr.mxu0 0.0
    %209 = vmatpush1.msra.mxu0 0.0
    %210 = vmatprep.subr.mxu0 0.0
    %211 = vmatpush1.msra.mxu0 0.0
    %212 = vmatprep.subr.mxu0 0.0
    %213 = vmatpush1.msra.mxu0 0.0
    %214 = vmatprep.subr.mxu0 0.0
    %215 = vmatpush1.msra.mxu0 0.0
    %216 = vmatprep.subr.mxu0 0.0
    %217 = vmatpush1.msra.mxu0 0.0
    %218 = vmatprep.subr.mxu0 0.0
    %219 = vmatpush1.msra.mxu0 0.0
    %220 = vmatprep.subr.mxu0 0.0
    %221 = vmatpush1.msra.mxu0 0.0
    %222 = vmatprep.subr.mxu0 0.0
    %223 = vmatpush1.msra.mxu0 0.0
    %224 = vmatprep.subr.mxu0 0.0
    %225 = vmatpush1.msra.mxu0 0.0
    %226 = vmatprep.subr.mxu0 0.0
    %227 = vmatpush1.msra.mxu0 0.0
    %228 = vmatprep.subr.mxu0 0.0
    %229 = vmatpush1.msra.mxu0 0.0
    %230 = vmatprep.subr.mxu0 0.0
    %231 = vmatpush1.msra.mxu0 0.0
    %232 = vmatprep.subr.mxu0 0.0
    %233 = vmatpush1.msra.mxu0 0.0
    %234 = vmatprep.subr.mxu0 0.0
    %235 = vmatpush1.msra.mxu0 0.0
    %236 = vmatprep.mubr.f32.mxu0 0.0
    %237 = vmatmul.mubr.f32.gmra.mrb[0].mxu0 %v154
    %v238 = vpop.f32.mrb[0].mxu0
    %v239 = vadd.f32 0.0, %v238
    %v240 = vpop.f32.mrb[0].mxu0
    %241 = vmatprep.mubr.f32.mxu0 0.0
    %242 = vmatmul.mubr.f32.gmra.mrb[0].mxu0 %v157
    %v243 = vpop.f32.mrb[0].mxu0
    %v244 = vadd.f32 0.0, %v243
    %v245 = vpop.f32.mrb[0].mxu0
    %246 = vmatprep.mubr.f32.mxu0 0.0
    %247 = vmatmul.mubr.f32.gmra.mrb[0].mxu0 %v160
    %v248 = vpop.f32.mrb[0].mxu0
    %v249 = vadd.f32 0.0, %v248
    %v250 = vpop.f32.mrb[0].mxu0
    %251 = vmatprep.mubr.f32.mxu0 0.0
    %252 = vmatmul.mubr.f32.gmra.mrb[0].mxu0 %v163
    %v253 = vpop.f32.mrb[0].mxu0
    %v254 = vadd.f32 0.0, %v253
    %v255 = vpop.f32.mrb[0].mxu0
    %256 = vmatprep.mubr.f32.mxu0 0.0
    %257 = vmatmul.mubr.f32.gmra.mrb[0].mxu0 %v166
    %v258 = vpop.f32.mrb[0].mxu0
    %v259 = vadd.f32 0.0, %v258
    %v260 = vpop.f32.mrb[0].mxu0
    %261 = vdwg.mxu0
    %263 = vrot.lane.b32.xlu0 %v144, 110
    %v264 = vpop.permute.xlu0 %263
    %265 = vrot.lane.b32.xlu0 %v149, 110
    %v266 = vpop.permute.xlu0 %265
    %v269 = vsel %vm152, %v60, 0
    %v272 = vsel %vm152, %v61, 0
    %v275 = vsel %vm152, %v62, 0
    %v278 = vsel %vm152, %v63, 0
    %v281 = vsel %vm152, %v64, 0
    %v283 = vsel %vm168, %v266, 0
    %285 = vmatprep.subr.mxu0 0.0
    %286 = vmatpush1.msra.mxu0 %v264
    %287 = vmatprep.subr.mxu0 0.0
    %288 = vmatpush1.msra.mxu0 %v283
    %289 = vmatprep.subr.mxu0 0.0
    %290 = vmatpush1.msra.mxu0 0.0
    %291 = vmatprep.subr.mxu0 0.0
    %292 = vmatpush1.msra.mxu0 0.0
    %293 = vmatprep.subr.mxu0 0.0
    %294 = vmatpush1.msra.mxu0 0.0
    %295 = vmatprep.subr.mxu0 0.0
    %296 = vmatpush1.msra.mxu0 0.0
    %297 = vmatprep.subr.mxu0 0.0
    %298 = vmatpush1.msra.mxu0 0.0
    %299 = vmatprep.subr.mxu0 0.0
    %300 = vmatpush1.msra.mxu0 0.0
    %301 = vmatprep.subr.mxu0 0.0
    %302 = vmatpush1.msra.mxu0 0.0
    %303 = vmatprep.subr.mxu0 0.0
    %304 = vmatpush1.msra.mxu0 0.0
    %305 = vmatprep.subr.mxu0 0.0
    %306 = vmatpush1.msra.mxu0 0.0
    %307 = vmatprep.subr.mxu0 0.0
    %308 = vmatpush1.msra.mxu0 0.0
    %309 = vmatprep.subr.mxu0 0.0
    %310 = vmatpush1.msra.mxu0 0.0
    %311 = vmatprep.subr.mxu0 0.0
    %312 = vmatpush1.msra.mxu0 0.0
    %313 = vmatprep.subr.mxu0 0.0
    %314 = vmatpush1.msra.mxu0 0.0
    %315 = vmatprep.subr.mxu0 0.0
    %316 = vmatpush1.msra.mxu0 0.0
    %317 = vmatprep.subr.mxu0 0.0
    %318 = vmatpush1.msra.mxu0 0.0
    %319 = vmatprep.subr.mxu0 0.0
    %320 = vmatpush1.msra.mxu0 0.0
    %321 = vmatprep.subr.mxu0 0.0
    %322 = vmatpush1.msra.mxu0 0.0
    %323 = vmatprep.subr.mxu0 0.0
    %324 = vmatpush1.msra.mxu0 0.0
    %325 = vmatprep.subr.mxu0 0.0
    %326 = vmatpush1.msra.mxu0 0.0
    %327 = vmatprep.subr.mxu0 0.0
    %328 = vmatpush1.msra.mxu0 0.0
    %329 = vmatprep.subr.mxu0 0.0
    %330 = vmatpush1.msra.mxu0 0.0
    %331 = vmatprep.subr.mxu0 0.0
    %332 = vmatpush1.msra.mxu0 0.0
    %333 = vmatprep.subr.mxu0 0.0
    %334 = vmatpush1.msra.mxu0 0.0
    %335 = vmatprep.subr.mxu0 0.0
    %336 = vmatpush1.msra.mxu0 0.0
    %337 = vmatprep.subr.mxu0 0.0
    %338 = vmatpush1.msra.mxu0 0.0
    %339 = vmatprep.subr.mxu0 0.0
    %340 = vmatpush1.msra.mxu0 0.0
    %341 = vmatprep.subr.mxu0 0.0
    %342 = vmatpush1.msra.mxu0 0.0
    %343 = vmatprep.subr.mxu0 0.0
    %344 = vmatpush1.msra.mxu0 0.0
    %345 = vmatprep.subr.mxu0 0.0
    %346 = vmatpush1.msra.mxu0 0.0
    %347 = vmatprep.subr.mxu0 0.0
    %348 = vmatpush1.msra.mxu0 0.0
    %349 = vmatprep.mubr.f32.mxu0 0.0
    %350 = vmatmul.mubr.f32.gmra.mrb[0].mxu0 %v269
    %v351 = vpop.f32.mrb[0].mxu0
    %v352 = vadd.f32 0.0, %v351
    %v353 = vpop.f32.mrb[0].mxu0
    %354 = vmatprep.mubr.f32.mxu0 0.0
    %355 = vmatmul.mubr.f32.gmra.mrb[0].mxu0 %v272
    %v356 = vpop.f32.mrb[0].mxu0
    %v357 = vadd.f32 0.0, %v356
    %v358 = vpop.f32.mrb[0].mxu0
    %359 = vmatprep.mubr.f32.mxu0 0.0
    %360 = vmatmul.mubr.f32.gmra.mrb[0].mxu0 %v275
    %v361 = vpop.f32.mrb[0].mxu0
    %v362 = vadd.f32 0.0, %v361
    %v363 = vpop.f32.mrb[0].mxu0
    %364 = vmatprep.mubr.f32.mxu0 0.0
    %365 = vmatmul.mubr.f32.gmra.mrb[0].mxu0 %v278
    %v366 = vpop.f32.mrb[0].mxu0
    %v367 = vadd.f32 0.0, %v366
    %v368 = vpop.f32.mrb[0].mxu0
    %369 = vmatprep.mubr.f32.mxu0 0.0
    %370 = vmatmul.mubr.f32.gmra.mrb[0].mxu0 %v281
    %v371 = vpop.f32.mrb[0].mxu0
    %v372 = vadd.f32 0.0, %v371
    %v373 = vpop.f32.mrb[0].mxu0
    %374 = vdwg.mxu0
    %380 = vrot.lane.b32.xlu0 %v352, 16
    %v381 = vpop.permute.xlu0 %380
    %382 = vrot.lane.b32.xlu0 %v357, 16
    %v383 = vpop.permute.xlu0 %382
    %384 = vrot.lane.b32.xlu0 %v362, 16
    %v385 = vpop.permute.xlu0 %384
    %386 = vrot.lane.b32.xlu0 %v367, 16
    %v387 = vpop.permute.xlu0 %386
    %388 = vrot.lane.b32.xlu0 %v372, 16
    %v389 = vpop.permute.xlu0 %388
    %v395 = vadd.f32 %v239, %v381
    %v396 = vadd.f32 %v244, %v383
    %v397 = vadd.f32 %v249, %v385
    %v398 = vadd.f32 %v254, %v387
    %v399 = vadd.f32 %v259, %v389
    %vm400 = vcmp.ge.f32.partialorder %v395, 0.0
    %vm401 = vcmp.ge.f32.partialorder %v396, 0.0
    %vm402 = vcmp.ge.f32.partialorder %v397, 0.0
    %vm403 = vcmp.ge.f32.partialorder %v398, 0.0
    %vm404 = vcmp.ge.f32.partialorder %v399, 0.0
    %v405 = vmul.f32 %v395, 0.2
    %v406 = vmul.f32 %v396, 0.2
    %v407 = vmul.f32 %v397, 0.2
    %v408 = vmul.f32 %v398, 0.2
    %v409 = vmul.f32 %v399, 0.2
    %v410 = vsel %vm400, %v395, %v405
    %v411 = vsel %vm401, %v396, %v406
    %v412 = vsel %vm402, %v397, %v407
    %v413 = vsel %vm403, %v398, %v408
    %v414 = vsel %vm404, %v399, %v409
    %vm415 = vcmask 146560
    %v416 = vsel %vm415, %v410, -inf
    %v417 = vsel %vm415, %v411, -inf
    %v418 = vsel %vm415, %v412, -inf
    %v419 = vsel %vm415, %v413, -inf
    %v420 = vsel %vm415, %v414, -inf
    %v421 = vmax.f32 %v416, %v420
    %v422 = vmax.f32 %v421, %v417
    %v423 = vmax.f32 %v418, %v419
    %v424 = vmax.f32 %v422, %v423
    %425 = vmax.xlane.f32.xlu0 %v424
    %v426 = vpop.xlane.xlu0 %425
    %v427 = vrot.slane %v426, 4
    %v428 = vmax.f32 %v426, %v427
    %v429 = vrot.slane %v428, 2
    %v430 = vmax.f32 %v428, %v429
    %v431 = vrot.slane %v430, 1
    %v432 = vmax.f32 %v430, %v431
    %s433 = vtos %v432
    %v434 = vstv %s433
    %v435 = vsub.f32 %v410, %v434
    %v436 = vsub.f32 %v411, %v434
    %v437 = vsub.f32 %v412, %v434
    %v438 = vsub.f32 %v413, %v434
    %v439 = vsub.f32 %v414, %v434
    %v440 = vmul.f32 %v435, 1.442695
    %v441 = vpow.pop %v440
    %v442 = vmul.f32 %v436, 1.442695
    %v443 = vpow.pop %v442
    %v444 = vmul.f32 %v437, 1.442695
    %v445 = vpow.pop %v444
    %v446 = vmul.f32 %v438, 1.442695
    %v447 = vpow.pop %v446
    %v448 = vmul.f32 %v439, 1.442695
    %v449 = vpow.pop %v448
    %450 = vxpose.xlu0.b32.start [1/16] %v60, 128
    %451 = vxpose.xlu0.b32.cont [2/16] %v61, 128
    %452 = vxpose.xlu0.b32.cont [3/16] %v62, 128
    %453 = vxpose.xlu0.b32.cont [4/16] %v63, 128
    %454 = vxpose.xlu0.b32.cont [5/16] %v64, 128
    %455 = vxpose.xlu0.b32.cont [6/16] 0.0, 128
    %456 = vxpose.xlu0.b32.cont [7/16] 0.0, 128
    %457 = vxpose.xlu0.b32.cont [8/16] 0.0, 128
    %458 = vxpose.xlu0.b32.cont [9/16] 0.0, 128
    %459 = vxpose.xlu0.b32.cont [10/16] 0.0, 128
    %460 = vxpose.xlu0.b32.cont [11/16] 0.0, 128
    %461 = vxpose.xlu0.b32.cont [12/16] 0.0, 128
    %462 = vxpose.xlu0.b32.cont [13/16] 0.0, 128
    %463 = vxpose.xlu0.b32.cont [14/16] 0.0, 128
    %464 = vxpose.xlu0.b32.cont [15/16] 0.0, 128
    %465 = vxpose.xlu0.b32.end [16/16] 0.0, 128
    %v466 = vpop.trf.xlu0
    %v467 = vpop.trf.xlu0
    %v468 = vpop.trf.xlu0
    %v469 = vpop.trf.xlu0
    %v470 = vpop.trf.xlu0
    %v471 = vpop.trf.xlu0
    %v472 = vpop.trf.xlu0
    %v473 = vpop.trf.xlu0
    %v474 = vpop.trf.xlu0
    %v475 = vpop.trf.xlu0
    %v476 = vpop.trf.xlu0
    %v477 = vpop.trf.xlu0
    %v478 = vpop.trf.xlu0
    %v479 = vpop.trf.xlu0
    %v480 = vpop.trf.xlu0
    %v481 = vpop.trf.xlu0
    %487 = vrot.lane.b32.xlu0 %v441, 112
    %v488 = vpop.permute.xlu0 %487
    %489 = vrot.lane.b32.xlu0 %v443, 112
    %v490 = vpop.permute.xlu0 %489
    %491 = vrot.lane.b32.xlu0 %v445, 112
    %v492 = vpop.permute.xlu0 %491
    %493 = vrot.lane.b32.xlu0 %v447, 112
    %v494 = vpop.permute.xlu0 %493
    %495 = vrot.lane.b32.xlu0 %v449, 112
    %v496 = vpop.permute.xlu0 %495
    %vm502 = vcmask 326656
    %v504 = vsel %vm502, %v466, 0
    %v507 = vsel %vm502, %v467, 0
    %509 = vmatprep.subr.mxu0 0.0
    %510 = vmatpush1.msra.mxu0 %v488
    %511 = vmatprep.subr.mxu0 0.0
    %512 = vmatpush1.msra.mxu0 %v490
    %513 = vmatprep.subr.mxu0 0.0
    %514 = vmatpush1.msra.mxu0 %v492
    %515 = vmatprep.subr.mxu0 0.0
    %516 = vmatpush1.msra.mxu0 %v494
    %517 = vmatprep.subr.mxu0 0.0
    %518 = vmatpush1.msra.mxu0 %v496
    %519 = vmatprep.subr.mxu0 0.0
    %520 = vmatpush1.msra.mxu0 0.0
    %521 = vmatprep.subr.mxu0 0.0
    %522 = vmatpush1.msra.mxu0 0.0
    %523 = vmatprep.subr.mxu0 0.0
    %524 = vmatpush1.msra.mxu0 0.0
    %525 = vmatprep.subr.mxu0 0.0
    %526 = vmatpush1.msra.mxu0 0.0
    %527 = vmatprep.subr.mxu0 0.0
    %528 = vmatpush1.msra.mxu0 0.0
    %529 = vmatprep.subr.mxu0 0.0
    %530 = vmatpush1.msra.mxu0 0.0
    %531 = vmatprep.subr.mxu0 0.0
    %532 = vmatpush1.msra.mxu0 0.0
    %533 = vmatprep.subr.mxu0 0.0
    %534 = vmatpush1.msra.mxu0 0.0
    %535 = vmatprep.subr.mxu0 0.0
    %536 = vmatpush1.msra.mxu0 0.0
    %537 = vmatprep.subr.mxu0 0.0
    %538 = vmatpush1.msra.mxu0 0.0
    %539 = vmatprep.subr.mxu0 0.0
    %540 = vmatpush1.msra.mxu0 0.0
    %541 = vmatprep.subr.mxu0 0.0
    %542 = vmatpush1.msra.mxu0 0.0
    %543 = vmatprep.subr.mxu0 0.0
    %544 = vmatpush1.msra.mxu0 0.0
    %545 = vmatprep.subr.mxu0 0.0
    %546 = vmatpush1.msra.mxu0 0.0
    %547 = vmatprep.subr.mxu0 0.0
    %548 = vmatpush1.msra.mxu0 0.0
    %549 = vmatprep.subr.mxu0 0.0
    %550 = vmatpush1.msra.mxu0 0.0
    %551 = vmatprep.subr.mxu0 0.0
    %552 = vmatpush1.msra.mxu0 0.0
    %553 = vmatprep.subr.mxu0 0.0
    %554 = vmatpush1.msra.mxu0 0.0
    %555 = vmatprep.subr.mxu0 0.0
    %556 = vmatpush1.msra.mxu0 0.0
    %557 = vmatprep.subr.mxu0 0.0
    %558 = vmatpush1.msra.mxu0 0.0
    %559 = vmatprep.subr.mxu0 0.0
    %560 = vmatpush1.msra.mxu0 0.0
    %561 = vmatprep.subr.mxu0 0.0
    %562 = vmatpush1.msra.mxu0 0.0
    %563 = vmatprep.subr.mxu0 0.0
    %564 = vmatpush1.msra.mxu0 0.0
    %565 = vmatprep.subr.mxu0 0.0
    %566 = vmatpush1.msra.mxu0 0.0
    %567 = vmatprep.subr.mxu0 0.0
    %568 = vmatpush1.msra.mxu0 0.0
    %569 = vmatprep.subr.mxu0 0.0
    %570 = vmatpush1.msra.mxu0 0.0
    %571 = vmatprep.subr.mxu0 0.0
    %572 = vmatpush1.msra.mxu0 0.0
    %573 = vmatprep.mubr.f32.mxu0 0.0
    %574 = vmatmul.mubr.f32.gmra.mrb[0].mxu0 %v504
    %v575 = vpop.f32.mrb[0].mxu0
    %v576 = vadd.f32 0.0, %v575
    %v577 = vpop.f32.mrb[0].mxu0
    %578 = vmatprep.mubr.f32.mxu0 0.0
    %579 = vmatmul.mubr.f32.gmra.mrb[0].mxu0 %v507
    %v580 = vpop.f32.mrb[0].mxu0
    %v581 = vadd.f32 0.0, %v580
    %v582 = vpop.f32.mrb[0].mxu0
    %583 = vdwg.mxu0
    %v585 = vsel %vm168, %v581, 0
    %587 = vmatprep.subr.mxu0 0.0
    %588 = vmatpush1.msra.mxu0 %v576
    %589 = vmatprep.subr.mxu0 0.0
    %590 = vmatpush1.msra.mxu0 %v585
    %591 = vmatprep.subr.mxu0 0.0
    %592 = vmatpush1.msra.mxu0 0.0
    %593 = vmatprep.subr.mxu0 0.0
    %594 = vmatpush1.msra.mxu0 0.0
    %595 = vmatprep.subr.mxu0 0.0
    %596 = vmatpush1.msra.mxu0 0.0
    %597 = vmatprep.subr.mxu0 0.0
    %598 = vmatpush1.msra.mxu0 0.0
    %599 = vmatprep.subr.mxu0 0.0
    %600 = vmatpush1.msra.mxu0 0.0
    %601 = vmatprep.subr.mxu0 0.0
    %602 = vmatpush1.msra.mxu0 0.0
    %603 = vmatprep.subr.mxu0 0.0
    %604 = vmatpush1.msra.mxu0 0.0
    %605 = vmatprep.subr.mxu0 0.0
    %606 = vmatpush1.msra.mxu0 0.0
    %607 = vmatprep.subr.mxu0 0.0
    %608 = vmatpush1.msra.mxu0 0.0
    %609 = vmatprep.subr.mxu0 0.0
    %610 = vmatpush1.msra.mxu0 0.0
    %611 = vmatprep.subr.mxu0 0.0
    %612 = vmatpush1.msra.mxu0 0.0
    %613 = vmatprep.subr.mxu0 0.0
    %614 = vmatpush1.msra.mxu0 0.0
    %615 = vmatprep.subr.mxu0 0.0
    %616 = vmatpush1.msra.mxu0 0.0
    %617 = vmatprep.subr.mxu0 0.0
    %618 = vmatpush1.msra.mxu0 0.0
    %619 = vmatprep.subr.mxu0 0.0
    %620 = vmatpush1.msra.mxu0 0.0
    %621 = vmatprep.subr.mxu0 0.0
    %622 = vmatpush1.msra.mxu0 0.0
    %623 = vmatprep.subr.mxu0 0.0
    %624 = vmatpush1.msra.mxu0 0.0
    %625 = vmatprep.subr.mxu0 0.0
    %626 = vmatpush1.msra.mxu0 0.0
    %627 = vmatprep.subr.mxu0 0.0
    %628 = vmatpush1.msra.mxu0 0.0
    %629 = vmatprep.subr.mxu0 0.0
    %630 = vmatpush1.msra.mxu0 0.0
    %631 = vmatprep.subr.mxu0 0.0
    %632 = vmatpush1.msra.mxu0 0.0
    %633 = vmatprep.subr.mxu0 0.0
    %634 = vmatpush1.msra.mxu0 0.0
    %635 = vmatprep.subr.mxu0 0.0
    %636 = vmatpush1.msra.mxu0 0.0
    %637 = vmatprep.subr.mxu0 0.0
    %638 = vmatpush1.msra.mxu0 0.0
    %639 = vmatprep.subr.mxu0 0.0
    %640 = vmatpush1.msra.mxu0 0.0
    %641 = vmatprep.subr.mxu0 0.0
    %642 = vmatpush1.msra.mxu0 0.0
    %643 = vmatprep.subr.mxu0 0.0
    %644 = vmatpush1.msra.mxu0 0.0
    %645 = vmatprep.subr.mxu0 0.0
    %646 = vmatpush1.msra.mxu0 0.0
    %647 = vmatprep.subr.mxu0 0.0
    %648 = vmatpush1.msra.mxu0 0.0
    %649 = vmatprep.subr.mxu0 0.0
    %650 = vmatpush1.msra.mxu0 0.0
    %651 = vmatprep.mubr.f32.mxu0 0.0
    %652 = vmatmul.mubr.f32.gmra.mrb[0].mxu0 %v269
    %v653 = vpop.f32.mrb[0].mxu0
    %v654 = vadd.f32 1e-16, %v653
    %v655 = vpop.f32.mrb[0].mxu0
    %656 = vmatprep.mubr.f32.mxu0 0.0
    %657 = vmatmul.mubr.f32.gmra.mrb[0].mxu0 %v272
    %v658 = vpop.f32.mrb[0].mxu0
    %v659 = vadd.f32 1e-16, %v658
    %v660 = vpop.f32.mrb[0].mxu0
    %661 = vmatprep.mubr.f32.mxu0 0.0
    %662 = vmatmul.mubr.f32.gmra.mrb[0].mxu0 %v275
    %v663 = vpop.f32.mrb[0].mxu0
    %v664 = vadd.f32 1e-16, %v663
    %v665 = vpop.f32.mrb[0].mxu0
    %666 = vmatprep.mubr.f32.mxu0 0.0
    %667 = vmatmul.mubr.f32.gmra.mrb[0].mxu0 %v278
    %v668 = vpop.f32.mrb[0].mxu0
    %v669 = vadd.f32 1e-16, %v668
    %v670 = vpop.f32.mrb[0].mxu0
    %671 = vmatprep.mubr.f32.mxu0 0.0
    %672 = vmatmul.mubr.f32.gmra.mrb[0].mxu0 %v281
    %v673 = vpop.f32.mrb[0].mxu0
    %v674 = vadd.f32 1e-16, %v673
    %v675 = vpop.f32.mrb[0].mxu0
    %676 = vdwg.mxu0
    %v677 = vrcp.pop %v654
    %v678 = vrcp.pop %v659
    %v679 = vrcp.pop %v664
    %v680 = vrcp.pop %v669
    %v681 = vrcp.pop %v674
    %687 = vrot.lane.b32.xlu0 %v677, 16
    %v688 = vpop.permute.xlu0 %687
    %689 = vrot.lane.b32.xlu0 %v678, 16
    %v690 = vpop.permute.xlu0 %689
    %691 = vrot.lane.b32.xlu0 %v679, 16
    %v692 = vpop.permute.xlu0 %691
    %693 = vrot.lane.b32.xlu0 %v680, 16
    %v694 = vpop.permute.xlu0 %693
    %695 = vrot.lane.b32.xlu0 %v681, 16
    %v696 = vpop.permute.xlu0 %695
    %v702 = vmul.f32 %v441, %v688
    %v703 = vmul.f32 %v443, %v690
    %v704 = vmul.f32 %v445, %v692
    %v705 = vmul.f32 %v447, %v694
    %v706 = vmul.f32 %v449, %v696
    %712 = vrot.lane.b32.xlu0 %v702, 112
    %v713 = vpop.permute.xlu0 %712
    %714 = vrot.lane.b32.xlu0 %v703, 112
    %v715 = vpop.permute.xlu0 %714
    %716 = vrot.lane.b32.xlu0 %v704, 112
    %v717 = vpop.permute.xlu0 %716
    %718 = vrot.lane.b32.xlu0 %v705, 112
    %v719 = vpop.permute.xlu0 %718
    %720 = vrot.lane.b32.xlu0 %v706, 112
    %v721 = vpop.permute.xlu0 %720
    %vm722 = vcmask 15360
    %v723 = vsel %vm722, %v713, 0
    %v725 = vsel %vm722, %v715, 0
    %v727 = vsel %vm722, %v717, 0
    %v729 = vsel %vm722, %v719, 0
    %v731 = vsel %vm722, %v721, 0
    %vm733 = vcmask 1041408
    %v735 = vsel %vm733, %v68, 0
    %737 = vmatprep.subr.mxu0 0.0
    %738 = vmatpush1.msra.mxu0 %v735
    %739 = vmatprep.subr.mxu0 0.0
    %740 = vmatpush1.msra.mxu0 0.0
    %741 = vmatprep.subr.mxu0 0.0
    %742 = vmatpush1.msra.mxu0 0.0
    %743 = vmatprep.subr.mxu0 0.0
    %744 = vmatpush1.msra.mxu0 0.0
    %745 = vmatprep.subr.mxu0 0.0
    %746 = vmatpush1.msra.mxu0 0.0
    %747 = vmatprep.subr.mxu0 0.0
    %748 = vmatpush1.msra.mxu0 0.0
    %749 = vmatprep.subr.mxu0 0.0
    %750 = vmatpush1.msra.mxu0 0.0
    %751 = vmatprep.subr.mxu0 0.0
    %752 = vmatpush1.msra.mxu0 0.0
    %753 = vmatprep.subr.mxu0 0.0
    %754 = vmatpush1.msra.mxu0 0.0
    %755 = vmatprep.subr.mxu0 0.0
    %756 = vmatpush1.msra.mxu0 0.0
    %757 = vmatprep.subr.mxu0 0.0
    %758 = vmatpush1.msra.mxu0 0.0
    %759 = vmatprep.subr.mxu0 0.0
    %760 = vmatpush1.msra.mxu0 0.0
    %761 = vmatprep.subr.mxu0 0.0
    %762 = vmatpush1.msra.mxu0 0.0
    %763 = vmatprep.subr.mxu0 0.0
    %764 = vmatpush1.msra.mxu0 0.0
    %765 = vmatprep.subr.mxu0 0.0
    %766 = vmatpush1.msra.mxu0 0.0
    %767 = vmatprep.subr.mxu0 0.0
    %768 = vmatpush1.msra.mxu0 0.0
    %769 = vmatprep.subr.mxu0 0.0
    %770 = vmatpush1.msra.mxu0 0.0
    %771 = vmatprep.subr.mxu0 0.0
    %772 = vmatpush1.msra.mxu0 0.0
    %773 = vmatprep.subr.mxu0 0.0
    %774 = vmatpush1.msra.mxu0 0.0
    %775 = vmatprep.subr.mxu0 0.0
    %776 = vmatpush1.msra.mxu0 0.0
    %777 = vmatprep.subr.mxu0 0.0
    %778 = vmatpush1.msra.mxu0 0.0
    %779 = vmatprep.subr.mxu0 0.0
    %780 = vmatpush1.msra.mxu0 0.0
    %781 = vmatprep.subr.mxu0 0.0
    %782 = vmatpush1.msra.mxu0 0.0
    %783 = vmatprep.subr.mxu0 0.0
    %784 = vmatpush1.msra.mxu0 0.0
    %785 = vmatprep.subr.mxu0 0.0
    %786 = vmatpush1.msra.mxu0 0.0
    %787 = vmatprep.subr.mxu0 0.0
    %788 = vmatpush1.msra.mxu0 0.0
    %789 = vmatprep.subr.mxu0 0.0
    %790 = vmatpush1.msra.mxu0 0.0
    %791 = vmatprep.subr.mxu0 0.0
    %792 = vmatpush1.msra.mxu0 0.0
    %793 = vmatprep.subr.mxu0 0.0
    %794 = vmatpush1.msra.mxu0 0.0
    %795 = vmatprep.subr.mxu0 0.0
    %796 = vmatpush1.msra.mxu0 0.0
    %797 = vmatprep.subr.mxu0 0.0
    %798 = vmatpush1.msra.mxu0 0.0
    %799 = vmatprep.subr.mxu0 0.0
    %800 = vmatpush1.msra.mxu0 0.0
    %801 = vmatprep.mubr.f32.mxu0 0.0
    %802 = vmatmul.mubr.f32.gmra.mrb[0].mxu0 %v723
    %v803 = vpop.f32.mrb[0].mxu0
    %v804 = vadd.f32 0.0, %v803
    %v805 = vpop.f32.mrb[0].mxu0
    %806 = vmatprep.mubr.f32.mxu0 0.0
    %807 = vmatmul.mubr.f32.gmra.mrb[0].mxu0 %v725
    %v808 = vpop.f32.mrb[0].mxu0
    %v809 = vadd.f32 0.0, %v808
    %v810 = vpop.f32.mrb[0].mxu0
    %811 = vmatprep.mubr.f32.mxu0 0.0
    %812 = vmatmul.mubr.f32.gmra.mrb[0].mxu0 %v727
    %v813 = vpop.f32.mrb[0].mxu0
    %v814 = vadd.f32 0.0, %v813
    %v815 = vpop.f32.mrb[0].mxu0
    %816 = vmatprep.mubr.f32.mxu0 0.0
    %817 = vmatmul.mubr.f32.gmra.mrb[0].mxu0 %v729
    %v818 = vpop.f32.mrb[0].mxu0
    %v819 = vadd.f32 0.0, %v818
    %v820 = vpop.f32.mrb[0].mxu0
    %821 = vmatprep.mubr.f32.mxu0 0.0
    %822 = vmatmul.mubr.f32.gmra.mrb[0].mxu0 %v731
    %v823 = vpop.f32.mrb[0].mxu0
    %v824 = vadd.f32 0.0, %v823
    %v825 = vpop.f32.mrb[0].mxu0
    %826 = vdwg.mxu0
    %v827 = vmul.f32 %v239, %v804
    %v828 = vmul.f32 %v244, %v809
    %v829 = vmul.f32 %v249, %v814
    %v830 = vmul.f32 %v254, %v819
    %v831 = vmul.f32 %v259, %v824
    %832 = vrot.lane.b32.xlu0 %v144, 108
    %v833 = vpop.permute.xlu0 %832
    %834 = vrot.lane.b32.xlu0 %v149, 108
    %v835 = vpop.permute.xlu0 %834
    %838 = vmatprep.subr.mxu0 0.0
    %839 = vmatpush1.msra.mxu0 %v827
    %840 = vmatprep.subr.mxu0 0.0
    %841 = vmatpush1.msra.mxu0 %v828
    %842 = vmatprep.subr.mxu0 0.0
    %843 = vmatpush1.msra.mxu0 %v829
    %844 = vmatprep.subr.mxu0 0.0
    %845 = vmatpush1.msra.mxu0 %v830
    %846 = vmatprep.subr.mxu0 0.0
    %847 = vmatpush1.msra.mxu0 %v831
    %848 = vmatprep.subr.mxu0 0.0
    %849 = vmatpush1.msra.mxu0 0.0
    %850 = vmatprep.subr.mxu0 0.0
    %851 = vmatpush1.msra.mxu0 0.0
    %852 = vmatprep.subr.mxu0 0.0
    %853 = vmatpush1.msra.mxu0 0.0
    %854 = vmatprep.subr.mxu0 0.0
    %855 = vmatpush1.msra.mxu0 0.0
    %856 = vmatprep.subr.mxu0 0.0
    %857 = vmatpush1.msra.mxu0 0.0
    %858 = vmatprep.subr.mxu0 0.0
    %859 = vmatpush1.msra.mxu0 0.0
    %860 = vmatprep.subr.mxu0 0.0
    %861 = vmatpush1.msra.mxu0 0.0
    %862 = vmatprep.subr.mxu0 0.0
    %863 = vmatpush1.msra.mxu0 0.0
    %864 = vmatprep.subr.mxu0 0.0
    %865 = vmatpush1.msra.mxu0 0.0
    %866 = vmatprep.subr.mxu0 0.0
    %867 = vmatpush1.msra.mxu0 0.0
    %868 = vmatprep.subr.mxu0 0.0
    %869 = vmatpush1.msra.mxu0 0.0
    %870 = vmatprep.subr.mxu0 0.0
    %871 = vmatpush1.msra.mxu0 0.0
    %872 = vmatprep.subr.mxu0 0.0
    %873 = vmatpush1.msra.mxu0 0.0
    %874 = vmatprep.subr.mxu0 0.0
    %875 = vmatpush1.msra.mxu0 0.0
    %876 = vmatprep.subr.mxu0 0.0
    %877 = vmatpush1.msra.mxu0 0.0
    %878 = vmatprep.subr.mxu0 0.0
    %879 = vmatpush1.msra.mxu0 0.0
    %880 = vmatprep.subr.mxu0 0.0
    %881 = vmatpush1.msra.mxu0 0.0
    %882 = vmatprep.subr.mxu0 0.0
    %883 = vmatpush1.msra.mxu0 0.0
    %884 = vmatprep.subr.mxu0 0.0
    %885 = vmatpush1.msra.mxu0 0.0
    %886 = vmatprep.subr.mxu0 0.0
    %887 = vmatpush1.msra.mxu0 0.0
    %888 = vmatprep.subr.mxu0 0.0
    %889 = vmatpush1.msra.mxu0 0.0
    %890 = vmatprep.subr.mxu0 0.0
    %891 = vmatpush1.msra.mxu0 0.0
    %892 = vmatprep.subr.mxu0 0.0
    %893 = vmatpush1.msra.mxu0 0.0
    %894 = vmatprep.subr.mxu0 0.0
    %895 = vmatpush1.msra.mxu0 0.0
    %896 = vmatprep.subr.mxu0 0.0
    %897 = vmatpush1.msra.mxu0 0.0
    %898 = vmatprep.subr.mxu0 0.0
    %899 = vmatpush1.msra.mxu0 0.0
    %900 = vmatprep.subr.mxu0 0.0
    %901 = vmatpush1.msra.mxu0 0.0
    %902 = vmatprep.mubr.f32.mxu0 0.0
    %903 = vmatmul.mubr.f32.gmra.mrb[0].mxu0 %v504
    %v904 = vpop.f32.mrb[0].mxu0
    %v905 = vadd.f32 %v833, %v904
    %v906 = vpop.f32.mrb[0].mxu0
    %907 = vmatprep.mubr.f32.mxu0 0.0
    %908 = vmatmul.mubr.f32.gmra.mrb[0].mxu0 %v507
    %v909 = vpop.f32.mrb[0].mxu0
    %v910 = vadd.f32 %v835, %v909
    %v911 = vpop.f32.mrb[0].mxu0
    %912 = vdwg.mxu0
    %v914 = vlaneseq
    %v915 = vshrl.u32 %v914, 7
    %v916 = vsub.s32 0, %v915
    %v917 = vrot.slane %v69, %v916
    %v919 = vadd.f32 %v905, %v917
    %v920 = vadd.f32 %v910, %v917
    %vm921 = vcmp.gt.f32.partialorder %v919, 0.0
    %vm922 = vcmp.gt.f32.partialorder %v920, 0.0
    %v923 = vmul.f32 %v919, 1.442695
    %v924 = vpow.pop %v923
    %v925 = vmul.f32 %v920, 1.442695
    %v926 = vpow.pop %v925
    %v927 = vsub.f32 %v924, 1.0
    %v928 = vsub.f32 %v926, 1.0
    %v929 = vsel %vm921, %v919, %v927
    %v930 = vsel %vm922, %v920, %v928
    %v931 = vld [vmem:[%s6] sm:$0xff]
    %v932 = vld [vmem:[%s6 + $0x8] sm:$0xff]
    %v933 = vld [vmem:[%s7] sm:$0x3]
    %v934 = vld [vmem:[%s8] sm:$0x1]
    %vm935 = vcmask 130048
    %v937 = vsel %vm935, %v929, 0
    %v940 = vsel %vm935, %v930, 0
    %942 = vmatprep.subr.mxu0 0.0
    %943 = vmatpush1.msra.mxu0 %v931
    %944 = vmatprep.subr.mxu0 0.0
    %945 = vmatpush1.msra.mxu0 %v932
    %946 = vmatprep.subr.mxu0 0.0
    %947 = vmatpush1.msra.mxu0 0.0
    %948 = vmatprep.subr.mxu0 0.0
    %949 = vmatpush1.msra.mxu0 0.0
    %950 = vmatprep.subr.mxu0 0.0
    %951 = vmatpush1.msra.mxu0 0.0
    %952 = vmatprep.subr.mxu0 0.0
    %953 = vmatpush1.msra.mxu0 0.0
    %954 = vmatprep.subr.mxu0 0.0
    %955 = vmatpush1.msra.mxu0 0.0
    %956 = vmatprep.subr.mxu0 0.0
    %957 = vmatpush1.msra.mxu0 0.0
    %958 = vmatprep.subr.mxu0 0.0
    %959 = vmatpush1.msra.mxu0 0.0
    %960 = vmatprep.subr.mxu0 0.0
    %961 = vmatpush1.msra.mxu0 0.0
    %962 = vmatprep.subr.mxu0 0.0
    %963 = vmatpush1.msra.mxu0 0.0
    %964 = vmatprep.subr.mxu0 0.0
    %965 = vmatpush1.msra.mxu0 0.0
    %966 = vmatprep.subr.mxu0 0.0
    %967 = vmatpush1.msra.mxu0 0.0
    %968 = vmatprep.subr.mxu0 0.0
    %969 = vmatpush1.msra.mxu0 0.0
    %970 = vmatprep.subr.mxu0 0.0
    %971 = vmatpush1.msra.mxu0 0.0
    %972 = vmatprep.subr.mxu0 0.0
    %973 = vmatpush1.msra.mxu0 0.0
    %974 = vmatprep.subr.mxu0 0.0
    %975 = vmatpush1.msra.mxu0 0.0
    %976 = vmatprep.subr.mxu0 0.0
    %977 = vmatpush1.msra.mxu0 0.0
    %978 = vmatprep.subr.mxu0 0.0
    %979 = vmatpush1.msra.mxu0 0.0
    %980 = vmatprep.subr.mxu0 0.0
    %981 = vmatpush1.msra.mxu0 0.0
    %982 = vmatprep.subr.mxu0 0.0
    %983 = vmatpush1.msra.mxu0 0.0
    %984 = vmatprep.subr.mxu0 0.0
    %985 = vmatpush1.msra.mxu0 0.0
    %986 = vmatprep.subr.mxu0 0.0
    %987 = vmatpush1.msra.mxu0 0.0
    %988 = vmatprep.subr.mxu0 0.0
    %989 = vmatpush1.msra.mxu0 0.0
    %990 = vmatprep.subr.mxu0 0.0
    %991 = vmatpush1.msra.mxu0 0.0
    %992 = vmatprep.subr.mxu0 0.0
    %993 = vmatpush1.msra.mxu0 0.0
    %994 = vmatprep.subr.mxu0 0.0
    %995 = vmatpush1.msra.mxu0 0.0
    %996 = vmatprep.subr.mxu0 0.0
    %997 = vmatpush1.msra.mxu0 0.0
    %998 = vmatprep.subr.mxu0 0.0
    %999 = vmatpush1.msra.mxu0 0.0
    %1000 = vmatprep.subr.mxu0 0.0
    %1001 = vmatpush1.msra.mxu0 0.0
    %1002 = vmatprep.subr.mxu0 0.0
    %1003 = vmatpush1.msra.mxu0 0.0
    %1004 = vmatprep.subr.mxu0 0.0
    %1005 = vmatpush1.msra.mxu0 0.0
    %1006 = vmatprep.mubr.f32.mxu0 0.0
    %1007 = vmatmul.mubr.f32.gmra.mrb[0].mxu0 %v937
    %v1008 = vpop.f32.mrb[0].mxu0
    %v1009 = vadd.f32 0.0, %v1008
    %v1010 = vpop.f32.mrb[0].mxu0
    %1011 = vmatprep.mubr.f32.mxu0 0.0
    %1012 = vmatmul.mubr.f32.gmra.mrb[0].mxu0 %v940
    %v1013 = vpop.f32.mrb[0].mxu0
    %v1014 = vadd.f32 0.0, %v1013
    %v1015 = vpop.f32.mrb[0].mxu0
    %1016 = vdwg.mxu0
    %v1018 = vsel %vm168, %v1014, 0
    %1020 = vmatprep.subr.mxu0 0.0
    %1021 = vmatpush1.msra.mxu0 %v1009
    %1022 = vmatprep.subr.mxu0 0.0
    %1023 = vmatpush1.msra.mxu0 %v1018
    %1024 = vmatprep.subr.mxu0 0.0
    %1025 = vmatpush1.msra.mxu0 0.0
    %1026 = vmatprep.subr.mxu0 0.0
    %1027 = vmatpush1.msra.mxu0 0.0
    %1028 = vmatprep.subr.mxu0 0.0
    %1029 = vmatpush1.msra.mxu0 0.0
    %1030 = vmatprep.subr.mxu0 0.0
    %1031 = vmatpush1.msra.mxu0 0.0
    %1032 = vmatprep.subr.mxu0 0.0
    %1033 = vmatpush1.msra.mxu0 0.0
    %1034 = vmatprep.subr.mxu0 0.0
    %1035 = vmatpush1.msra.mxu0 0.0
    %1036 = vmatprep.subr.mxu0 0.0
    %1037 = vmatpush1.msra.mxu0 0.0
    %1038 = vmatprep.subr.mxu0 0.0
    %1039 = vmatpush1.msra.mxu0 0.0
    %1040 = vmatprep.subr.mxu0 0.0
    %1041 = vmatpush1.msra.mxu0 0.0
    %1042 = vmatprep.subr.mxu0 0.0
    %1043 = vmatpush1.msra.mxu0 0.0
    %1044 = vmatprep.subr.mxu0 0.0
    %1045 = vmatpush1.msra.mxu0 0.0
    %1046 = vmatprep.subr.mxu0 0.0
    %1047 = vmatpush1.msra.mxu0 0.0
    %1048 = vmatprep.subr.mxu0 0.0
    %1049 = vmatpush1.msra.mxu0 0.0
    %1050 = vmatprep.subr.mxu0 0.0
    %1051 = vmatpush1.msra.mxu0 0.0
    %1052 = vmatprep.subr.mxu0 0.0
    %1053 = vmatpush1.msra.mxu0 0.0
    %1054 = vmatprep.subr.mxu0 0.0
    %1055 = vmatpush1.msra.mxu0 0.0
    %1056 = vmatprep.subr.mxu0 0.0
    %1057 = vmatpush1.msra.mxu0 0.0
    %1058 = vmatprep.subr.mxu0 0.0
    %1059 = vmatpush1.msra.mxu0 0.0
    %1060 = vmatprep.subr.mxu0 0.0
    %1061 = vmatpush1.msra.mxu0 0.0
    %1062 = vmatprep.subr.mxu0 0.0
    %1063 = vmatpush1.msra.mxu0 0.0
    %1064 = vmatprep.subr.mxu0 0.0
    %1065 = vmatpush1.msra.mxu0 0.0
    %1066 = vmatprep.subr.mxu0 0.0
    %1067 = vmatpush1.msra.mxu0 0.0
    %1068 = vmatprep.subr.mxu0 0.0
    %1069 = vmatpush1.msra.mxu0 0.0
    %1070 = vmatprep.subr.mxu0 0.0
    %1071 = vmatpush1.msra.mxu0 0.0
    %1072 = vmatprep.subr.mxu0 0.0
    %1073 = vmatpush1.msra.mxu0 0.0
    %1074 = vmatprep.subr.mxu0 0.0
    %1075 = vmatpush1.msra.mxu0 0.0
    %1076 = vmatprep.subr.mxu0 0.0
    %1077 = vmatpush1.msra.mxu0 0.0
    %1078 = vmatprep.subr.mxu0 0.0
    %1079 = vmatpush1.msra.mxu0 0.0
    %1080 = vmatprep.subr.mxu0 0.0
    %1081 = vmatpush1.msra.mxu0 0.0
    %1082 = vmatprep.subr.mxu0 0.0
    %1083 = vmatpush1.msra.mxu0 0.0
    %1084 = vmatprep.mubr.f32.mxu0 0.0
    %1085 = vmatmul.mubr.f32.gmra.mrb[0].mxu0 %v154
    %v1086 = vpop.f32.mrb[0].mxu0
    %v1087 = vadd.f32 0.0, %v1086
    %v1088 = vpop.f32.mrb[0].mxu0
    %1089 = vmatprep.mubr.f32.mxu0 0.0
    %1090 = vmatmul.mubr.f32.gmra.mrb[0].mxu0 %v157
    %v1091 = vpop.f32.mrb[0].mxu0
    %v1092 = vadd.f32 0.0, %v1091
    %v1093 = vpop.f32.mrb[0].mxu0
    %1094 = vmatprep.mubr.f32.mxu0 0.0
    %1095 = vmatmul.mubr.f32.gmra.mrb[0].mxu0 %v160
    %v1096 = vpop.f32.mrb[0].mxu0
    %v1097 = vadd.f32 0.0, %v1096
    %v1098 = vpop.f32.mrb[0].mxu0
    %1099 = vmatprep.mubr.f32.mxu0 0.0
    %1100 = vmatmul.mubr.f32.gmra.mrb[0].mxu0 %v163
    %v1101 = vpop.f32.mrb[0].mxu0
    %v1102 = vadd.f32 0.0, %v1101
    %v1103 = vpop.f32.mrb[0].mxu0
    %1104 = vmatprep.mubr.f32.mxu0 0.0
    %1105 = vmatmul.mubr.f32.gmra.mrb[0].mxu0 %v166
    %v1106 = vpop.f32.mrb[0].mxu0
    %v1107 = vadd.f32 0.0, %v1106
    %v1108 = vpop.f32.mrb[0].mxu0
    %1109 = vdwg.mxu0
    %1111 = vrot.lane.b32.xlu0 %v1009, 94
    %v1112 = vpop.permute.xlu0 %1111
    %1113 = vrot.lane.b32.xlu0 %v1014, 94
    %v1114 = vpop.permute.xlu0 %1113
    %v1116 = vsel %vm168, %v1114, 0
    %1118 = vmatprep.subr.mxu0 0.0
    %1119 = vmatpush1.msra.mxu0 %v1112
    %1120 = vmatprep.subr.mxu0 0.0
    %1121 = vmatpush1.msra.mxu0 %v1116
    %1122 = vmatprep.subr.mxu0 0.0
    %1123 = vmatpush1.msra.mxu0 0.0
    %1124 = vmatprep.subr.mxu0 0.0
    %1125 = vmatpush1.msra.mxu0 0.0
    %1126 = vmatprep.subr.mxu0 0.0
    %1127 = vmatpush1.msra.mxu0 0.0
    %1128 = vmatprep.subr.mxu0 0.0
    %1129 = vmatpush1.msra.mxu0 0.0
    %1130 = vmatprep.subr.mxu0 0.0
    %1131 = vmatpush1.msra.mxu0 0.0
    %1132 = vmatprep.subr.mxu0 0.0
    %1133 = vmatpush1.msra.mxu0 0.0
    %1134 = vmatprep.subr.mxu0 0.0
    %1135 = vmatpush1.msra.mxu0 0.0
    %1136 = vmatprep.subr.mxu0 0.0
    %1137 = vmatpush1.msra.mxu0 0.0
    %1138 = vmatprep.subr.mxu0 0.0
    %1139 = vmatpush1.msra.mxu0 0.0
    %1140 = vmatprep.subr.mxu0 0.0
    %1141 = vmatpush1.msra.mxu0 0.0
    %1142 = vmatprep.subr.mxu0 0.0
    %1143 = vmatpush1.msra.mxu0 0.0
    %1144 = vmatprep.subr.mxu0 0.0
    %1145 = vmatpush1.msra.mxu0 0.0
    %1146 = vmatprep.subr.mxu0 0.0
    %1147 = vmatpush1.msra.mxu0 0.0
    %1148 = vmatprep.subr.mxu0 0.0
    %1149 = vmatpush1.msra.mxu0 0.0
    %1150 = vmatprep.subr.mxu0 0.0
    %1151 = vmatpush1.msra.mxu0 0.0
    %1152 = vmatprep.subr.mxu0 0.0
    %1153 = vmatpush1.msra.mxu0 0.0
    %1154 = vmatprep.subr.mxu0 0.0
    %1155 = vmatpush1.msra.mxu0 0.0
    %1156 = vmatprep.subr.mxu0 0.0
    %1157 = vmatpush1.msra.mxu0 0.0
    %1158 = vmatprep.subr.mxu0 0.0
    %1159 = vmatpush1.msra.mxu0 0.0
    %1160 = vmatprep.subr.mxu0 0.0
    %1161 = vmatpush1.msra.mxu0 0.0
    %1162 = vmatprep.subr.mxu0 0.0
    %1163 = vmatpush1.msra.mxu0 0.0
    %1164 = vmatprep.subr.mxu0 0.0
    %1165 = vmatpush1.msra.mxu0 0.0
    %1166 = vmatprep.subr.mxu0 0.0
    %1167 = vmatpush1.msra.mxu0 0.0
    %1168 = vmatprep.subr.mxu0 0.0
    %1169 = vmatpush1.msra.mxu0 0.0
    %1170 = vmatprep.subr.mxu0 0.0
    %1171 = vmatpush1.msra.mxu0 0.0
    %1172 = vmatprep.subr.mxu0 0.0
    %1173 = vmatpush1.msra.mxu0 0.0
    %1174 = vmatprep.subr.mxu0 0.0
    %1175 = vmatpush1.msra.mxu0 0.0
    %1176 = vmatprep.subr.mxu0 0.0
    %1177 = vmatpush1.msra.mxu0 0.0
    %1178 = vmatprep.subr.mxu0 0.0
    %1179 = vmatpush1.msra.mxu0 0.0
    %1180 = vmatprep.subr.mxu0 0.0
    %1181 = vmatpush1.msra.mxu0 0.0
    %1182 = vmatprep.mubr.f32.mxu0 0.0
    %1183 = vmatmul.mubr.f32.gmra.mrb[0].mxu0 %v269
    %v1184 = vpop.f32.mrb[0].mxu0
    %v1185 = vadd.f32 0.0, %v1184
    %v1186 = vpop.f32.mrb[0].mxu0
    %1187 = vmatprep.mubr.f32.mxu0 0.0
    %1188 = vmatmul.mubr.f32.gmra.mrb[0].mxu0 %v272
    %v1189 = vpop.f32.mrb[0].mxu0
    %v1190 = vadd.f32 0.0, %v1189
    %v1191 = vpop.f32.mrb[0].mxu0
    %1192 = vmatprep.mubr.f32.mxu0 0.0
    %1193 = vmatmul.mubr.f32.gmra.mrb[0].mxu0 %v275
    %v1194 = vpop.f32.mrb[0].mxu0
    %v1195 = vadd.f32 0.0, %v1194
    %v1196 = vpop.f32.mrb[0].mxu0
    %1197 = vmatprep.mubr.f32.mxu0 0.0
    %1198 = vmatmul.mubr.f32.gmra.mrb[0].mxu0 %v278
    %v1199 = vpop.f32.mrb[0].mxu0
    %v1200 = vadd.f32 0.0, %v1199
    %v1201 = vpop.f32.mrb[0].mxu0
    %1202 = vmatprep.mubr.f32.mxu0 0.0
    %1203 = vmatmul.mubr.f32.gmra.mrb[0].mxu0 %v281
    %v1204 = vpop.f32.mrb[0].mxu0
    %v1205 = vadd.f32 0.0, %v1204
    %v1206 = vpop.f32.mrb[0].mxu0
    %1207 = vdwg.mxu0
    %1213 = vrot.lane.b32.xlu0 %v1185, 32
    %v1214 = vpop.permute.xlu0 %1213
    %1215 = vrot.lane.b32.xlu0 %v1190, 32
    %v1216 = vpop.permute.xlu0 %1215
    %1217 = vrot.lane.b32.xlu0 %v1195, 32
    %v1218 = vpop.permute.xlu0 %1217
    %1219 = vrot.lane.b32.xlu0 %v1200, 32
    %v1220 = vpop.permute.xlu0 %1219
    %1221 = vrot.lane.b32.xlu0 %v1205, 32
    %v1222 = vpop.permute.xlu0 %1221
    %v1228 = vadd.f32 %v1087, %v1214
    %v1229 = vadd.f32 %v1092, %v1216
    %v1230 = vadd.f32 %v1097, %v1218
    %v1231 = vadd.f32 %v1102, %v1220
    %v1232 = vadd.f32 %v1107, %v1222
    %vm1233 = vcmp.ge.f32.partialorder %v1228, 0.0
    %vm1234 = vcmp.ge.f32.partialorder %v1229, 0.0
    %vm1235 = vcmp.ge.f32.partialorder %v1230, 0.0
    %vm1236 = vcmp.ge.f32.partialorder %v1231, 0.0
    %vm1237 = vcmp.ge.f32.partialorder %v1232, 0.0
    %v1238 = vmul.f32 %v1228, 0.2
    %v1239 = vmul.f32 %v1229, 0.2
    %v1240 = vmul.f32 %v1230, 0.2
    %v1241 = vmul.f32 %v1231, 0.2
    %v1242 = vmul.f32 %v1232, 0.2
    %v1243 = vsel %vm1233, %v1228, %v1238
    %v1244 = vsel %vm1234, %v1229, %v1239
    %v1245 = vsel %vm1235, %v1230, %v1240
    %v1246 = vsel %vm1236, %v1231, %v1241
    %v1247 = vsel %vm1237, %v1232, %v1242
    %vm1248 = vcmask 277760
    %v1249 = vsel %vm1248, %v1243, -inf
    %v1250 = vsel %vm1248, %v1244, -inf
    %v1251 = vsel %vm1248, %v1245, -inf
    %v1252 = vsel %vm1248, %v1246, -inf
    %v1253 = vsel %vm1248, %v1247, -inf
    %v1254 = vmax.f32 %v1249, %v1253
    %v1255 = vmax.f32 %v1254, %v1250
    %v1256 = vmax.f32 %v1251, %v1252
    %v1257 = vmax.f32 %v1255, %v1256
    %1258 = vmax.xlane.f32.xlu0 %v1257
    %v1259 = vpop.xlane.xlu0 %1258
    %v1260 = vrot.slane %v1259, 4
    %v1261 = vmax.f32 %v1259, %v1260
    %v1262 = vrot.slane %v1261, 2
    %v1263 = vmax.f32 %v1261, %v1262
    %v1264 = vrot.slane %v1263, 1
    %v1265 = vmax.f32 %v1263, %v1264
    %s1266 = vtos %v1265
    %v1267 = vstv %s1266
    %v1268 = vsub.f32 %v1243, %v1267
    %v1269 = vsub.f32 %v1244, %v1267
    %v1270 = vsub.f32 %v1245, %v1267
    %v1271 = vsub.f32 %v1246, %v1267
    %v1272 = vsub.f32 %v1247, %v1267
    %v1273 = vmul.f32 %v1268, 1.442695
    %v1274 = vpow.pop %v1273
    %v1275 = vmul.f32 %v1269, 1.442695
    %v1276 = vpow.pop %v1275
    %v1277 = vmul.f32 %v1270, 1.442695
    %v1278 = vpow.pop %v1277
    %v1279 = vmul.f32 %v1271, 1.442695
    %v1280 = vpow.pop %v1279
    %v1281 = vmul.f32 %v1272, 1.442695
    %v1282 = vpow.pop %v1281
    %1288 = vrot.lane.b32.xlu0 %v1274, 96
    %v1289 = vpop.permute.xlu0 %1288
    %1290 = vrot.lane.b32.xlu0 %v1276, 96
    %v1291 = vpop.permute.xlu0 %1290
    %1292 = vrot.lane.b32.xlu0 %v1278, 96
    %v1293 = vpop.permute.xlu0 %1292
    %1294 = vrot.lane.b32.xlu0 %v1280, 96
    %v1295 = vpop.permute.xlu0 %1294
    %1296 = vrot.lane.b32.xlu0 %v1282, 96
    %v1297 = vpop.permute.xlu0 %1296
    %1303 = vmatprep.subr.mxu0 0.0
    %1304 = vmatpush1.msra.mxu0 %v1289
    %1305 = vmatprep.subr.mxu0 0.0
    %1306 = vmatpush1.msra.mxu0 %v1291
    %1307 = vmatprep.subr.mxu0 0.0
    %1308 = vmatpush1.msra.mxu0 %v1293
    %1309 = vmatprep.subr.mxu0 0.0
    %1310 = vmatpush1.msra.mxu0 %v1295
    %1311 = vmatprep.subr.mxu0 0.0
    %1312 = vmatpush1.msra.mxu0 %v1297
    %1313 = vmatprep.subr.mxu0 0.0
    %1314 = vmatpush1.msra.mxu0 0.0
    %1315 = vmatprep.subr.mxu0 0.0
    %1316 = vmatpush1.msra.mxu0 0.0
    %1317 = vmatprep.subr.mxu0 0.0
    %1318 = vmatpush1.msra.mxu0 0.0
    %1319 = vmatprep.subr.mxu0 0.0
    %1320 = vmatpush1.msra.mxu0 0.0
    %1321 = vmatprep.subr.mxu0 0.0
    %1322 = vmatpush1.msra.mxu0 0.0
    %1323 = vmatprep.subr.mxu0 0.0
    %1324 = vmatpush1.msra.mxu0 0.0
    %1325 = vmatprep.subr.mxu0 0.0
    %1326 = vmatpush1.msra.mxu0 0.0
    %1327 = vmatprep.subr.mxu0 0.0
    %1328 = vmatpush1.msra.mxu0 0.0
    %1329 = vmatprep.subr.mxu0 0.0
    %1330 = vmatpush1.msra.mxu0 0.0
    %1331 = vmatprep.subr.mxu0 0.0
    %1332 = vmatpush1.msra.mxu0 0.0
    %1333 = vmatprep.subr.mxu0 0.0
    %1334 = vmatpush1.msra.mxu0 0.0
    %1335 = vmatprep.subr.mxu0 0.0
    %1336 = vmatpush1.msra.mxu0 0.0
    %1337 = vmatprep.subr.mxu0 0.0
    %1338 = vmatpush1.msra.mxu0 0.0
    %1339 = vmatprep.subr.mxu0 0.0
    %1340 = vmatpush1.msra.mxu0 0.0
    %1341 = vmatprep.subr.mxu0 0.0
    %1342 = vmatpush1.msra.mxu0 0.0
    %1343 = vmatprep.subr.mxu0 0.0
    %1344 = vmatpush1.msra.mxu0 0.0
    %1345 = vmatprep.subr.mxu0 0.0
    %1346 = vmatpush1.msra.mxu0 0.0
    %1347 = vmatprep.subr.mxu0 0.0
    %1348 = vmatpush1.msra.mxu0 0.0
    %1349 = vmatprep.subr.mxu0 0.0
    %1350 = vmatpush1.msra.mxu0 0.0
    %1351 = vmatprep.subr.mxu0 0.0
    %1352 = vmatpush1.msra.mxu0 0.0
    %1353 = vmatprep.subr.mxu0 0.0
    %1354 = vmatpush1.msra.mxu0 0.0
    %1355 = vmatprep.subr.mxu0 0.0
    %1356 = vmatpush1.msra.mxu0 0.0
    %1357 = vmatprep.subr.mxu0 0.0
    %1358 = vmatpush1.msra.mxu0 0.0
    %1359 = vmatprep.subr.mxu0 0.0
    %1360 = vmatpush1.msra.mxu0 0.0
    %1361 = vmatprep.subr.mxu0 0.0
    %1362 = vmatpush1.msra.mxu0 0.0
    %1363 = vmatprep.subr.mxu0 0.0
    %1364 = vmatpush1.msra.mxu0 0.0
    %1365 = vmatprep.subr.mxu0 0.0
    %1366 = vmatpush1.msra.mxu0 0.0
    %1367 = vmatprep.mubr.f32.mxu0 0.0
    %1368 = vmatmul.mubr.f32.gmra.mrb[0].mxu0 %v504
    %v1369 = vpop.f32.mrb[0].mxu0
    %v1370 = vadd.f32 0.0, %v1369
    %v1371 = vpop.f32.mrb[0].mxu0
    %1372 = vmatprep.mubr.f32.mxu0 0.0
    %1373 = vmatmul.mubr.f32.gmra.mrb[0].mxu0 %v507
    %v1374 = vpop.f32.mrb[0].mxu0
    %v1375 = vadd.f32 0.0, %v1374
    %v1376 = vpop.f32.mrb[0].mxu0
    %1377 = vdwg.mxu0
    %v1379 = vsel %vm168, %v1375, 0
    %1381 = vmatprep.subr.mxu0 0.0
    %1382 = vmatpush1.msra.mxu0 %v1370
    %1383 = vmatprep.subr.mxu0 0.0
    %1384 = vmatpush1.msra.mxu0 %v1379
    %1385 = vmatprep.subr.mxu0 0.0
    %1386 = vmatpush1.msra.mxu0 0.0
    %1387 = vmatprep.subr.mxu0 0.0
    %1388 = vmatpush1.msra.mxu0 0.0
    %1389 = vmatprep.subr.mxu0 0.0
    %1390 = vmatpush1.msra.mxu0 0.0
    %1391 = vmatprep.subr.mxu0 0.0
    %1392 = vmatpush1.msra.mxu0 0.0
    %1393 = vmatprep.subr.mxu0 0.0
    %1394 = vmatpush1.msra.mxu0 0.0
    %1395 = vmatprep.subr.mxu0 0.0
    %1396 = vmatpush1.msra.mxu0 0.0
    %1397 = vmatprep.subr.mxu0 0.0
    %1398 = vmatpush1.msra.mxu0 0.0
    %1399 = vmatprep.subr.mxu0 0.0
    %1400 = vmatpush1.msra.mxu0 0.0
    %1401 = vmatprep.subr.mxu0 0.0
    %1402 = vmatpush1.msra.mxu0 0.0
    %1403 = vmatprep.subr.mxu0 0.0
    %1404 = vmatpush1.msra.mxu0 0.0
    %1405 = vmatprep.subr.mxu0 0.0
    %1406 = vmatpush1.msra.mxu0 0.0
    %1407 = vmatprep.subr.mxu0 0.0
    %1408 = vmatpush1.msra.mxu0 0.0
    %1409 = vmatprep.subr.mxu0 0.0
    %1410 = vmatpush1.msra.mxu0 0.0
    %1411 = vmatprep.subr.mxu0 0.0
    %1412 = vmatpush1.msra.mxu0 0.0
    %1413 = vmatprep.subr.mxu0 0.0
    %1414 = vmatpush1.msra.mxu0 0.0
    %1415 = vmatprep.subr.mxu0 0.0
    %1416 = vmatpush1.msra.mxu0 0.0
    %1417 = vmatprep.subr.mxu0 0.0
    %1418 = vmatpush1.msra.mxu0 0.0
    %1419 = vmatprep.subr.mxu0 0.0
    %1420 = vmatpush1.msra.mxu0 0.0
    %1421 = vmatprep.subr.mxu0 0.0
    %1422 = vmatpush1.msra.mxu0 0.0
    %1423 = vmatprep.subr.mxu0 0.0
    %1424 = vmatpush1.msra.mxu0 0.0
    %1425 = vmatprep.subr.mxu0 0.0
    %1426 = vmatpush1.msra.mxu0 0.0
    %1427 = vmatprep.subr.mxu0 0.0
    %1428 = vmatpush1.msra.mxu0 0.0
    %1429 = vmatprep.subr.mxu0 0.0
    %1430 = vmatpush1.msra.mxu0 0.0
    %1431 = vmatprep.subr.mxu0 0.0
    %1432 = vmatpush1.msra.mxu0 0.0
    %1433 = vmatprep.subr.mxu0 0.0
    %1434 = vmatpush1.msra.mxu0 0.0
    %1435 = vmatprep.subr.mxu0 0.0
    %1436 = vmatpush1.msra.mxu0 0.0
    %1437 = vmatprep.subr.mxu0 0.0
    %1438 = vmatpush1.msra.mxu0 0.0
    %1439 = vmatprep.subr.mxu0 0.0
    %1440 = vmatpush1.msra.mxu0 0.0
    %1441 = vmatprep.subr.mxu0 0.0
    %1442 = vmatpush1.msra.mxu0 0.0
    %1443 = vmatprep.subr.mxu0 0.0
    %1444 = vmatpush1.msra.mxu0 0.0
    %1445 = vmatprep.mubr.f32.mxu0 0.0
    %1446 = vmatmul.mubr.f32.gmra.mrb[0].mxu0 %v269
    %v1447 = vpop.f32.mrb[0].mxu0
    %v1448 = vadd.f32 1e-16, %v1447
    %v1449 = vpop.f32.mrb[0].mxu0
    %1450 = vmatprep.mubr.f32.mxu0 0.0
    %1451 = vmatmul.mubr.f32.gmra.mrb[0].mxu0 %v272
    %v1452 = vpop.f32.mrb[0].mxu0
    %v1453 = vadd.f32 1e-16, %v1452
    %v1454 = vpop.f32.mrb[0].mxu0
    %1455 = vmatprep.mubr.f32.mxu0 0.0
    %1456 = vmatmul.mubr.f32.gmra.mrb[0].mxu0 %v275
    %v1457 = vpop.f32.mrb[0].mxu0
    %v1458 = vadd.f32 1e-16, %v1457
    %v1459 = vpop.f32.mrb[0].mxu0
    %1460 = vmatprep.mubr.f32.mxu0 0.0
    %1461 = vmatmul.mubr.f32.gmra.mrb[0].mxu0 %v278
    %v1462 = vpop.f32.mrb[0].mxu0
    %v1463 = vadd.f32 1e-16, %v1462
    %v1464 = vpop.f32.mrb[0].mxu0
    %1465 = vmatprep.mubr.f32.mxu0 0.0
    %1466 = vmatmul.mubr.f32.gmra.mrb[0].mxu0 %v281
    %v1467 = vpop.f32.mrb[0].mxu0
    %v1468 = vadd.f32 1e-16, %v1467
    %v1469 = vpop.f32.mrb[0].mxu0
    %1470 = vdwg.mxu0
    %v1471 = vrcp.pop %v1448
    %v1472 = vrcp.pop %v1453
    %v1473 = vrcp.pop %v1458
    %v1474 = vrcp.pop %v1463
    %v1475 = vrcp.pop %v1468
    %1481 = vrot.lane.b32.xlu0 %v1471, 32
    %v1482 = vpop.permute.xlu0 %1481
    %1483 = vrot.lane.b32.xlu0 %v1472, 32
    %v1484 = vpop.permute.xlu0 %1483
    %1485 = vrot.lane.b32.xlu0 %v1473, 32
    %v1486 = vpop.permute.xlu0 %1485
    %1487 = vrot.lane.b32.xlu0 %v1474, 32
    %v1488 = vpop.permute.xlu0 %1487
    %1489 = vrot.lane.b32.xlu0 %v1475, 32
    %v1490 = vpop.permute.xlu0 %1489
    %v1496 = vmul.f32 %v1274, %v1482
    %v1497 = vmul.f32 %v1276, %v1484
    %v1498 = vmul.f32 %v1278, %v1486
    %v1499 = vmul.f32 %v1280, %v1488
    %v1500 = vmul.f32 %v1282, %v1490
    %1506 = vrot.lane.b32.xlu0 %v1496, 96
    %v1507 = vpop.permute.xlu0 %1506
    %1508 = vrot.lane.b32.xlu0 %v1497, 96
    %v1509 = vpop.permute.xlu0 %1508
    %1510 = vrot.lane.b32.xlu0 %v1498, 96
    %v1511 = vpop.permute.xlu0 %1510
    %1512 = vrot.lane.b32.xlu0 %v1499, 96
    %v1513 = vpop.permute.xlu0 %1512
    %1514 = vrot.lane.b32.xlu0 %v1500, 96
    %v1515 = vpop.permute.xlu0 %1514
    %v1516 = vsel %vm722, %v1507, 0
    %v1518 = vsel %vm722, %v1509, 0
    %v1520 = vsel %vm722, %v1511, 0
    %v1522 = vsel %vm722, %v1513, 0
    %v1524 = vsel %vm722, %v1515, 0
    %v1527 = vsel %vm733, %v933, 0
    %1529 = vmatprep.subr.mxu0 0.0
    %1530 = vmatpush1.msra.mxu0 %v1527
    %1531 = vmatprep.subr.mxu0 0.0
    %1532 = vmatpush1.msra.mxu0 0.0
    %1533 = vmatprep.subr.mxu0 0.0
    %1534 = vmatpush1.msra.mxu0 0.0
    %1535 = vmatprep.subr.mxu0 0.0
    %1536 = vmatpush1.msra.mxu0 0.0
    %1537 = vmatprep.subr.mxu0 0.0
    %1538 = vmatpush1.msra.mxu0 0.0
    %1539 = vmatprep.subr.mxu0 0.0
    %1540 = vmatpush1.msra.mxu0 0.0
    %1541 = vmatprep.subr.mxu0 0.0
    %1542 = vmatpush1.msra.mxu0 0.0
    %1543 = vmatprep.subr.mxu0 0.0
    %1544 = vmatpush1.msra.mxu0 0.0
    %1545 = vmatprep.subr.mxu0 0.0
    %1546 = vmatpush1.msra.mxu0 0.0
    %1547 = vmatprep.subr.mxu0 0.0
    %1548 = vmatpush1.msra.mxu0 0.0
    %1549 = vmatprep.subr.mxu0 0.0
    %1550 = vmatpush1.msra.mxu0 0.0
    %1551 = vmatprep.subr.mxu0 0.0
    %1552 = vmatpush1.msra.mxu0 0.0
    %1553 = vmatprep.subr.mxu0 0.0
    %1554 = vmatpush1.msra.mxu0 0.0
    %1555 = vmatprep.subr.mxu0 0.0
    %1556 = vmatpush1.msra.mxu0 0.0
    %1557 = vmatprep.subr.mxu0 0.0
    %1558 = vmatpush1.msra.mxu0 0.0
    %1559 = vmatprep.subr.mxu0 0.0
    %1560 = vmatpush1.msra.mxu0 0.0
    %1561 = vmatprep.subr.mxu0 0.0
    %1562 = vmatpush1.msra.mxu0 0.0
    %1563 = vmatprep.subr.mxu0 0.0
    %1564 = vmatpush1.msra.mxu0 0.0
    %1565 = vmatprep.subr.mxu0 0.0
    %1566 = vmatpush1.msra.mxu0 0.0
    %1567 = vmatprep.subr.mxu0 0.0
    %1568 = vmatpush1.msra.mxu0 0.0
    %1569 = vmatprep.subr.mxu0 0.0
    %1570 = vmatpush1.msra.mxu0 0.0
    %1571 = vmatprep.subr.mxu0 0.0
    %1572 = vmatpush1.msra.mxu0 0.0
    %1573 = vmatprep.subr.mxu0 0.0
    %1574 = vmatpush1.msra.mxu0 0.0
    %1575 = vmatprep.subr.mxu0 0.0
    %1576 = vmatpush1.msra.mxu0 0.0
    %1577 = vmatprep.subr.mxu0 0.0
    %1578 = vmatpush1.msra.mxu0 0.0
    %1579 = vmatprep.subr.mxu0 0.0
    %1580 = vmatpush1.msra.mxu0 0.0
    %1581 = vmatprep.subr.mxu0 0.0
    %1582 = vmatpush1.msra.mxu0 0.0
    %1583 = vmatprep.subr.mxu0 0.0
    %1584 = vmatpush1.msra.mxu0 0.0
    %1585 = vmatprep.subr.mxu0 0.0
    %1586 = vmatpush1.msra.mxu0 0.0
    %1587 = vmatprep.subr.mxu0 0.0
    %1588 = vmatpush1.msra.mxu0 0.0
    %1589 = vmatprep.subr.mxu0 0.0
    %1590 = vmatpush1.msra.mxu0 0.0
    %1591 = vmatprep.subr.mxu0 0.0
    %1592 = vmatpush1.msra.mxu0 0.0
    %1593 = vmatprep.mubr.f32.mxu0 0.0
    %1594 = vmatmul.mubr.f32.gmra.mrb[0].mxu0 %v1516
    %v1595 = vpop.f32.mrb[0].mxu0
    %v1596 = vadd.f32 0.0, %v1595
    %v1597 = vpop.f32.mrb[0].mxu0
    %1598 = vmatprep.mubr.f32.mxu0 0.0
    %1599 = vmatmul.mubr.f32.gmra.mrb[0].mxu0 %v1518
    %v1600 = vpop.f32.mrb[0].mxu0
    %v1601 = vadd.f32 0.0, %v1600
    %v1602 = vpop.f32.mrb[0].mxu0
    %1603 = vmatprep.mubr.f32.mxu0 0.0
    %1604 = vmatmul.mubr.f32.gmra.mrb[0].mxu0 %v1520
    %v1605 = vpop.f32.mrb[0].mxu0
    %v1606 = vadd.f32 0.0, %v1605
    %v1607 = vpop.f32.mrb[0].mxu0
    %1608 = vmatprep.mubr.f32.mxu0 0.0
    %1609 = vmatmul.mubr.f32.gmra.mrb[0].mxu0 %v1522
    %v1610 = vpop.f32.mrb[0].mxu0
    %v1611 = vadd.f32 0.0, %v1610
    %v1612 = vpop.f32.mrb[0].mxu0
    %1613 = vmatprep.mubr.f32.mxu0 0.0
    %1614 = vmatmul.mubr.f32.gmra.mrb[0].mxu0 %v1524
    %v1615 = vpop.f32.mrb[0].mxu0
    %v1616 = vadd.f32 0.0, %v1615
    %v1617 = vpop.f32.mrb[0].mxu0
    %1618 = vdwg.mxu0
    %v1619 = vmul.f32 %v1087, %v1596
    %v1620 = vmul.f32 %v1092, %v1601
    %v1621 = vmul.f32 %v1097, %v1606
    %v1622 = vmul.f32 %v1102, %v1611
    %v1623 = vmul.f32 %v1107, %v1616
    %1624 = vrot.lane.b32.xlu0 %v1009, 92
    %v1625 = vpop.permute.xlu0 %1624
    %1626 = vrot.lane.b32.xlu0 %v1014, 92
    %v1627 = vpop.permute.xlu0 %1626
    %1630 = vmatprep.subr.mxu0 0.0
    %1631 = vmatpush1.msra.mxu0 %v1619
    %1632 = vmatprep.subr.mxu0 0.0
    %1633 = vmatpush1.msra.mxu0 %v1620
    %1634 = vmatprep.subr.mxu0 0.0
    %1635 = vmatpush1.msra.mxu0 %v1621
    %1636 = vmatprep.subr.mxu0 0.0
    %1637 = vmatpush1.msra.mxu0 %v1622
    %1638 = vmatprep.subr.mxu0 0.0
    %1639 = vmatpush1.msra.mxu0 %v1623
    %1640 = vmatprep.subr.mxu0 0.0
    %1641 = vmatpush1.msra.mxu0 0.0
    %1642 = vmatprep.subr.mxu0 0.0
    %1643 = vmatpush1.msra.mxu0 0.0
    %1644 = vmatprep.subr.mxu0 0.0
    %1645 = vmatpush1.msra.mxu0 0.0
    %1646 = vmatprep.subr.mxu0 0.0
    %1647 = vmatpush1.msra.mxu0 0.0
    %1648 = vmatprep.subr.mxu0 0.0
    %1649 = vmatpush1.msra.mxu0 0.0
    %1650 = vmatprep.subr.mxu0 0.0
    %1651 = vmatpush1.msra.mxu0 0.0
    %1652 = vmatprep.subr.mxu0 0.0
    %1653 = vmatpush1.msra.mxu0 0.0
    %1654 = vmatprep.subr.mxu0 0.0
    %1655 = vmatpush1.msra.mxu0 0.0
    %1656 = vmatprep.subr.mxu0 0.0
    %1657 = vmatpush1.msra.mxu0 0.0
    %1658 = vmatprep.subr.mxu0 0.0
    %1659 = vmatpush1.msra.mxu0 0.0
    %1660 = vmatprep.subr.mxu0 0.0
    %1661 = vmatpush1.msra.mxu0 0.0
    %1662 = vmatprep.subr.mxu0 0.0
    %1663 = vmatpush1.msra.mxu0 0.0
    %1664 = vmatprep.subr.mxu0 0.0
    %1665 = vmatpush1.msra.mxu0 0.0
    %1666 = vmatprep.subr.mxu0 0.0
    %1667 = vmatpush1.msra.mxu0 0.0
    %1668 = vmatprep.subr.mxu0 0.0
    %1669 = vmatpush1.msra.mxu0 0.0
    %1670 = vmatprep.subr.mxu0 0.0
    %1671 = vmatpush1.msra.mxu0 0.0
    %1672 = vmatprep.subr.mxu0 0.0
    %1673 = vmatpush1.msra.mxu0 0.0
    %1674 = vmatprep.subr.mxu0 0.0
    %1675 = vmatpush1.msra.mxu0 0.0
    %1676 = vmatprep.subr.mxu0 0.0
    %1677 = vmatpush1.msra.mxu0 0.0
    %1678 = vmatprep.subr.mxu0 0.0
    %1679 = vmatpush1.msra.mxu0 0.0
    %1680 = vmatprep.subr.mxu0 0.0
    %1681 = vmatpush1.msra.mxu0 0.0
    %1682 = vmatprep.subr.mxu0 0.0
    %1683 = vmatpush1.msra.mxu0 0.0
    %1684 = vmatprep.subr.mxu0 0.0
    %1685 = vmatpush1.msra.mxu0 0.0
    %1686 = vmatprep.subr.mxu0 0.0
    %1687 = vmatpush1.msra.mxu0 0.0
    %1688 = vmatprep.subr.mxu0 0.0
    %1689 = vmatpush1.msra.mxu0 0.0
    %1690 = vmatprep.subr.mxu0 0.0
    %1691 = vmatpush1.msra.mxu0 0.0
    %1692 = vmatprep.subr.mxu0 0.0
    %1693 = vmatpush1.msra.mxu0 0.0
    %1694 = vmatprep.mubr.f32.mxu0 0.0
    %1695 = vmatmul.mubr.f32.gmra.mrb[0].mxu0 %v504
    %v1696 = vpop.f32.mrb[0].mxu0
    %v1697 = vadd.f32 %v1625, %v1696
    %v1698 = vpop.f32.mrb[0].mxu0
    %1699 = vmatprep.mubr.f32.mxu0 0.0
    %1700 = vmatmul.mubr.f32.gmra.mrb[0].mxu0 %v507
    %v1701 = vpop.f32.mrb[0].mxu0
    %v1702 = vadd.f32 %v1627, %v1701
    %v1703 = vpop.f32.mrb[0].mxu0
    %1704 = vdwg.mxu0
    %v1706 = vlaneseq
    %v1707 = vshrl.u32 %v1706, 7
    %v1708 = vsub.s32 0, %v1707
    %v1709 = vrot.slane %v934, %v1708
    %v1711 = vadd.f32 %v1697, %v1709
    %v1712 = vadd.f32 %v1702, %v1709
    %vm1713 = vcmp.gt.f32.partialorder %v1711, 0.0
    %vm1714 = vcmp.gt.f32.partialorder %v1712, 0.0
    %v1715 = vmul.f32 %v1711, 1.442695
    %v1716 = vpow.pop %v1715
    %v1717 = vmul.f32 %v1712, 1.442695
    %v1718 = vpow.pop %v1717
    %v1719 = vsub.f32 %v1716, 1.0
    %v1720 = vsub.f32 %v1718, 1.0
    %v1721 = vsel %vm1713, %v1711, %v1719
    %v1722 = vsel %vm1714, %v1712, %v1720
    %v1723 = vld [vmem:[%s9] sm:$0xff]
    %v1724 = vld [vmem:[%s9 + $0x8] sm:$0xff]
    %v1725 = vld [vmem:[%s9 + $0x10] sm:$0xff]
    %v1726 = vld [vmem:[%s9 + $0x18] sm:$0xff]
    %v1727 = vld [vmem:[%s10] sm:$0x3]
    %v1728 = vld [vmem:[%s11] sm:$0x1]
    %v1729 = vld [vmem:[%s12] sm:$0xff]
    %v1730 = vld [vmem:[%s12 + $0x8] sm:$0xff]
    %v1731 = vld [vmem:[%s12 + $0x10] sm:$0xff]
    %vm1732 = vcmask 261120
    %v1734 = vsel %vm1732, %v1721, 0
    %v1737 = vsel %vm1732, %v1722, 0
    %1739 = vmatprep.subr.mxu0 0.0
    %1740 = vmatpush1.msra.mxu0 %v1723
    %1741 = vmatprep.subr.mxu0 0.0
    %1742 = vmatpush1.msra.mxu0 %v1724
    %1743 = vmatprep.subr.mxu0 0.0
    %1744 = vmatpush1.msra.mxu0 %v1725
    %1745 = vmatprep.subr.mxu0 0.0
    %1746 = vmatpush1.msra.mxu0 %v1726
    %1747 = vmatprep.subr.mxu0 0.0
    %1748 = vmatpush1.msra.mxu0 0.0
    %1749 = vmatprep.subr.mxu0 0.0
    %1750 = vmatpush1.msra.mxu0 0.0
    %1751 = vmatprep.subr.mxu0 0.0
    %1752 = vmatpush1.msra.mxu0 0.0
    %1753 = vmatprep.subr.mxu0 0.0
    %1754 = vmatpush1.msra.mxu0 0.0
    %1755 = vmatprep.subr.mxu0 0.0
    %1756 = vmatpush1.msra.mxu0 0.0
    %1757 = vmatprep.subr.mxu0 0.0
    %1758 = vmatpush1.msra.mxu0 0.0
    %1759 = vmatprep.subr.mxu0 0.0
    %1760 = vmatpush1.msra.mxu0 0.0
    %1761 = vmatprep.subr.mxu0 0.0
    %1762 = vmatpush1.msra.mxu0 0.0
    %1763 = vmatprep.subr.mxu0 0.0
    %1764 = vmatpush1.msra.mxu0 0.0
    %1765 = vmatprep.subr.mxu0 0.0
    %1766 = vmatpush1.msra.mxu0 0.0
    %1767 = vmatprep.subr.mxu0 0.0
    %1768 = vmatpush1.msra.mxu0 0.0
    %1769 = vmatprep.subr.mxu0 0.0
    %1770 = vmatpush1.msra.mxu0 0.0
    %1771 = vmatprep.subr.mxu0 0.0
    %1772 = vmatpush1.msra.mxu0 0.0
    %1773 = vmatprep.subr.mxu0 0.0
    %1774 = vmatpush1.msra.mxu0 0.0
    %1775 = vmatprep.subr.mxu0 0.0
    %1776 = vmatpush1.msra.mxu0 0.0
    %1777 = vmatprep.subr.mxu0 0.0
    %1778 = vmatpush1.msra.mxu0 0.0
    %1779 = vmatprep.subr.mxu0 0.0
    %1780 = vmatpush1.msra.mxu0 0.0
    %1781 = vmatprep.subr.mxu0 0.0
    %1782 = vmatpush1.msra.mxu0 0.0
    %1783 = vmatprep.subr.mxu0 0.0
    %1784 = vmatpush1.msra.mxu0 0.0
    %1785 = vmatprep.subr.mxu0 0.0
    %1786 = vmatpush1.msra.mxu0 0.0
    %1787 = vmatprep.subr.mxu0 0.0
    %1788 = vmatpush1.msra.mxu0 0.0
    %1789 = vmatprep.subr.mxu0 0.0
    %1790 = vmatpush1.msra.mxu0 0.0
    %1791 = vmatprep.subr.mxu0 0.0
    %1792 = vmatpush1.msra.mxu0 0.0
    %1793 = vmatprep.subr.mxu0 0.0
    %1794 = vmatpush1.msra.mxu0 0.0
    %1795 = vmatprep.subr.mxu0 0.0
    %1796 = vmatpush1.msra.mxu0 0.0
    %1797 = vmatprep.subr.mxu0 0.0
    %1798 = vmatpush1.msra.mxu0 0.0
    %1799 = vmatprep.subr.mxu0 0.0
    %1800 = vmatpush1.msra.mxu0 0.0
    %1801 = vmatprep.subr.mxu0 0.0
    %1802 = vmatpush1.msra.mxu0 0.0
    %1803 = vmatprep.mubr.f32.mxu0 0.0
    %1804 = vmatmul.mubr.f32.gmra.mrb[0].mxu0 %v1734
    %v1805 = vpop.f32.mrb[0].mxu0
    %v1806 = vadd.f32 0.0, %v1805
    %v1807 = vpop.f32.mrb[0].mxu0
    %1808 = vmatprep.mubr.f32.mxu0 0.0
    %1809 = vmatmul.mubr.f32.gmra.mrb[0].mxu0 %v1737
    %v1810 = vpop.f32.mrb[0].mxu0
    %v1811 = vadd.f32 0.0, %v1810
    %v1812 = vpop.f32.mrb[0].mxu0
    %1813 = vdwg.mxu0
    %v1815 = vsel %vm168, %v1811, 0
    %1817 = vmatprep.subr.mxu0 0.0
    %1818 = vmatpush1.msra.mxu0 %v1806
    %1819 = vmatprep.subr.mxu0 0.0
    %1820 = vmatpush1.msra.mxu0 %v1815
    %1821 = vmatprep.subr.mxu0 0.0
    %1822 = vmatpush1.msra.mxu0 0.0
    %1823 = vmatprep.subr.mxu0 0.0
    %1824 = vmatpush1.msra.mxu0 0.0
    %1825 = vmatprep.subr.mxu0 0.0
    %1826 = vmatpush1.msra.mxu0 0.0
    %1827 = vmatprep.subr.mxu0 0.0
    %1828 = vmatpush1.msra.mxu0 0.0
    %1829 = vmatprep.subr.mxu0 0.0
    %1830 = vmatpush1.msra.mxu0 0.0
    %1831 = vmatprep.subr.mxu0 0.0
    %1832 = vmatpush1.msra.mxu0 0.0
    %1833 = vmatprep.subr.mxu0 0.0
    %1834 = vmatpush1.msra.mxu0 0.0
    %1835 = vmatprep.subr.mxu0 0.0
    %1836 = vmatpush1.msra.mxu0 0.0
    %1837 = vmatprep.subr.mxu0 0.0
    %1838 = vmatpush1.msra.mxu0 0.0
    %1839 = vmatprep.subr.mxu0 0.0
    %1840 = vmatpush1.msra.mxu0 0.0
    %1841 = vmatprep.subr.mxu0 0.0
    %1842 = vmatpush1.msra.mxu0 0.0
    %1843 = vmatprep.subr.mxu0 0.0
    %1844 = vmatpush1.msra.mxu0 0.0
    %1845 = vmatprep.subr.mxu0 0.0
    %1846 = vmatpush1.msra.mxu0 0.0
    %1847 = vmatprep.subr.mxu0 0.0
    %1848 = vmatpush1.msra.mxu0 0.0
    %1849 = vmatprep.subr.mxu0 0.0
    %1850 = vmatpush1.msra.mxu0 0.0
    %1851 = vmatprep.subr.mxu0 0.0
    %1852 = vmatpush1.msra.mxu0 0.0
    %1853 = vmatprep.subr.mxu0 0.0
    %1854 = vmatpush1.msra.mxu0 0.0
    %1855 = vmatprep.subr.mxu0 0.0
    %1856 = vmatpush1.msra.mxu0 0.0
    %1857 = vmatprep.subr.mxu0 0.0
    %1858 = vmatpush1.msra.mxu0 0.0
    %1859 = vmatprep.subr.mxu0 0.0
    %1860 = vmatpush1.msra.mxu0 0.0
    %1861 = vmatprep.subr.mxu0 0.0
    %1862 = vmatpush1.msra.mxu0 0.0
    %1863 = vmatprep.subr.mxu0 0.0
    %1864 = vmatpush1.msra.mxu0 0.0
    %1865 = vmatprep.subr.mxu0 0.0
    %1866 = vmatpush1.msra.mxu0 0.0
    %1867 = vmatprep.subr.mxu0 0.0
    %1868 = vmatpush1.msra.mxu0 0.0
    %1869 = vmatprep.subr.mxu0 0.0
    %1870 = vmatpush1.msra.mxu0 0.0
    %1871 = vmatprep.subr.mxu0 0.0
    %1872 = vmatpush1.msra.mxu0 0.0
    %1873 = vmatprep.subr.mxu0 0.0
    %1874 = vmatpush1.msra.mxu0 0.0
    %1875 = vmatprep.subr.mxu0 0.0
    %1876 = vmatpush1.msra.mxu0 0.0
    %1877 = vmatprep.subr.mxu0 0.0
    %1878 = vmatpush1.msra.mxu0 0.0
    %1879 = vmatprep.subr.mxu0 0.0
    %1880 = vmatpush1.msra.mxu0 0.0
    %1881 = vmatprep.mubr.f32.mxu0 0.0
    %1882 = vmatmul.mubr.f32.gmra.mrb[0].mxu0 %v154
    %v1883 = vpop.f32.mrb[0].mxu0
    %v1884 = vadd.f32 0.0, %v1883
    %v1885 = vpop.f32.mrb[0].mxu0
    %1886 = vmatprep.mubr.f32.mxu0 0.0
    %1887 = vmatmul.mubr.f32.gmra.mrb[0].mxu0 %v157
    %v1888 = vpop.f32.mrb[0].mxu0
    %v1889 = vadd.f32 0.0, %v1888
    %v1890 = vpop.f32.mrb[0].mxu0
    %1891 = vmatprep.mubr.f32.mxu0 0.0
    %1892 = vmatmul.mubr.f32.gmra.mrb[0].mxu0 %v160
    %v1893 = vpop.f32.mrb[0].mxu0
    %v1894 = vadd.f32 0.0, %v1893
    %v1895 = vpop.f32.mrb[0].mxu0
    %1896 = vmatprep.mubr.f32.mxu0 0.0
    %1897 = vmatmul.mubr.f32.gmra.mrb[0].mxu0 %v163
    %v1898 = vpop.f32.mrb[0].mxu0
    %v1899 = vadd.f32 0.0, %v1898
    %v1900 = vpop.f32.mrb[0].mxu0
    %1901 = vmatprep.mubr.f32.mxu0 0.0
    %1902 = vmatmul.mubr.f32.gmra.mrb[0].mxu0 %v166
    %v1903 = vpop.f32.mrb[0].mxu0
    %v1904 = vadd.f32 0.0, %v1903
    %v1905 = vpop.f32.mrb[0].mxu0
    %1906 = vdwg.mxu0
    %1908 = vrot.lane.b32.xlu0 %v1806, 102
    %v1909 = vpop.permute.xlu0 %1908
    %1910 = vrot.lane.b32.xlu0 %v1811, 102
    %v1911 = vpop.permute.xlu0 %1910
    %v1913 = vsel %vm168, %v1911, 0
    %1915 = vmatprep.subr.mxu0 0.0
    %1916 = vmatpush1.msra.mxu0 %v1909
    %1917 = vmatprep.subr.mxu0 0.0
    %1918 = vmatpush1.msra.mxu0 %v1913
    %1919 = vmatprep.subr.mxu0 0.0
    %1920 = vmatpush1.msra.mxu0 0.0
    %1921 = vmatprep.subr.mxu0 0.0
    %1922 = vmatpush1.msra.mxu0 0.0
    %1923 = vmatprep.subr.mxu0 0.0
    %1924 = vmatpush1.msra.mxu0 0.0
    %1925 = vmatprep.subr.mxu0 0.0
    %1926 = vmatpush1.msra.mxu0 0.0
    %1927 = vmatprep.subr.mxu0 0.0
    %1928 = vmatpush1.msra.mxu0 0.0
    %1929 = vmatprep.subr.mxu0 0.0
    %1930 = vmatpush1.msra.mxu0 0.0
    %1931 = vmatprep.subr.mxu0 0.0
    %1932 = vmatpush1.msra.mxu0 0.0
    %1933 = vmatprep.subr.mxu0 0.0
    %1934 = vmatpush1.msra.mxu0 0.0
    %1935 = vmatprep.subr.mxu0 0.0
    %1936 = vmatpush1.msra.mxu0 0.0
    %1937 = vmatprep.subr.mxu0 0.0
    %1938 = vmatpush1.msra.mxu0 0.0
    %1939 = vmatprep.subr.mxu0 0.0
    %1940 = vmatpush1.msra.mxu0 0.0
    %1941 = vmatprep.subr.mxu0 0.0
    %1942 = vmatpush1.msra.mxu0 0.0
    %1943 = vmatprep.subr.mxu0 0.0
    %1944 = vmatpush1.msra.mxu0 0.0
    %1945 = vmatprep.subr.mxu0 0.0
    %1946 = vmatpush1.msra.mxu0 0.0
    %1947 = vmatprep.subr.mxu0 0.0
    %1948 = vmatpush1.msra.mxu0 0.0
    %1949 = vmatprep.subr.mxu0 0.0
    %1950 = vmatpush1.msra.mxu0 0.0
    %1951 = vmatprep.subr.mxu0 0.0
    %1952 = vmatpush1.msra.mxu0 0.0
    %1953 = vmatprep.subr.mxu0 0.0
    %1954 = vmatpush1.msra.mxu0 0.0
    %1955 = vmatprep.subr.mxu0 0.0
    %1956 = vmatpush1.msra.mxu0 0.0
    %1957 = vmatprep.subr.mxu0 0.0
    %1958 = vmatpush1.msra.mxu0 0.0
    %1959 = vmatprep.subr.mxu0 0.0
    %1960 = vmatpush1.msra.mxu0 0.0
    %1961 = vmatprep.subr.mxu0 0.0
    %1962 = vmatpush1.msra.mxu0 0.0
    %1963 = vmatprep.subr.mxu0 0.0
    %1964 = vmatpush1.msra.mxu0 0.0
    %1965 = vmatprep.subr.mxu0 0.0
    %1966 = vmatpush1.msra.mxu0 0.0
    %1967 = vmatprep.subr.mxu0 0.0
    %1968 = vmatpush1.msra.mxu0 0.0
    %1969 = vmatprep.subr.mxu0 0.0
    %1970 = vmatpush1.msra.mxu0 0.0
    %1971 = vmatprep.subr.mxu0 0.0
    %1972 = vmatpush1.msra.mxu0 0.0
    %1973 = vmatprep.subr.mxu0 0.0
    %1974 = vmatpush1.msra.mxu0 0.0
    %1975 = vmatprep.subr.mxu0 0.0
    %1976 = vmatpush1.msra.mxu0 0.0
    %1977 = vmatprep.subr.mxu0 0.0
    %1978 = vmatpush1.msra.mxu0 0.0
    %1979 = vmatprep.mubr.f32.mxu0 0.0
    %1980 = vmatmul.mubr.f32.gmra.mrb[0].mxu0 %v269
    %v1981 = vpop.f32.mrb[0].mxu0
    %v1982 = vadd.f32 0.0, %v1981
    %v1983 = vpop.f32.mrb[0].mxu0
    %1984 = vmatprep.mubr.f32.mxu0 0.0
    %1985 = vmatmul.mubr.f32.gmra.mrb[0].mxu0 %v272
    %v1986 = vpop.f32.mrb[0].mxu0
    %v1987 = vadd.f32 0.0, %v1986
    %v1988 = vpop.f32.mrb[0].mxu0
    %1989 = vmatprep.mubr.f32.mxu0 0.0
    %1990 = vmatmul.mubr.f32.gmra.mrb[0].mxu0 %v275
    %v1991 = vpop.f32.mrb[0].mxu0
    %v1992 = vadd.f32 0.0, %v1991
    %v1993 = vpop.f32.mrb[0].mxu0
    %1994 = vmatprep.mubr.f32.mxu0 0.0
    %1995 = vmatmul.mubr.f32.gmra.mrb[0].mxu0 %v278
    %v1996 = vpop.f32.mrb[0].mxu0
    %v1997 = vadd.f32 0.0, %v1996
    %v1998 = vpop.f32.mrb[0].mxu0
    %1999 = vmatprep.mubr.f32.mxu0 0.0
    %2000 = vmatmul.mubr.f32.gmra.mrb[0].mxu0 %v281
    %v2001 = vpop.f32.mrb[0].mxu0
    %v2002 = vadd.f32 0.0, %v2001
    %v2003 = vpop.f32.mrb[0].mxu0
    %2004 = vdwg.mxu0
    %2010 = vrot.lane.b32.xlu0 %v1982, 24
    %v2011 = vpop.permute.xlu0 %2010
    %2012 = vrot.lane.b32.xlu0 %v1987, 24
    %v2013 = vpop.permute.xlu0 %2012
    %2014 = vrot.lane.b32.xlu0 %v1992, 24
    %v2015 = vpop.permute.xlu0 %2014
    %2016 = vrot.lane.b32.xlu0 %v1997, 24
    %v2017 = vpop.permute.xlu0 %2016
    %2018 = vrot.lane.b32.xlu0 %v2002, 24
    %v2019 = vpop.permute.xlu0 %2018
    %v2025 = vadd.f32 %v1884, %v2011
    %v2026 = vadd.f32 %v1889, %v2013
    %v2027 = vadd.f32 %v1894, %v2015
    %v2028 = vadd.f32 %v1899, %v2017
    %v2029 = vadd.f32 %v1904, %v2019
    %vm2030 = vcmp.ge.f32.partialorder %v2025, 0.0
    %vm2031 = vcmp.ge.f32.partialorder %v2026, 0.0
    %vm2032 = vcmp.ge.f32.partialorder %v2027, 0.0
    %vm2033 = vcmp.ge.f32.partialorder %v2028, 0.0
    %vm2034 = vcmp.ge.f32.partialorder %v2029, 0.0
    %v2035 = vmul.f32 %v2025, 0.2
    %v2036 = vmul.f32 %v2026, 0.2
    %v2037 = vmul.f32 %v2027, 0.2
    %v2038 = vmul.f32 %v2028, 0.2
    %v2039 = vmul.f32 %v2029, 0.2
    %v2040 = vsel %vm2030, %v2025, %v2035
    %v2041 = vsel %vm2031, %v2026, %v2036
    %v2042 = vsel %vm2032, %v2027, %v2037
    %v2043 = vsel %vm2033, %v2028, %v2038
    %v2044 = vsel %vm2034, %v2029, %v2039
    %vm2045 = vcmask 212160
    %v2046 = vsel %vm2045, %v2040, -inf
    %v2047 = vsel %vm2045, %v2041, -inf
    %v2048 = vsel %vm2045, %v2042, -inf
    %v2049 = vsel %vm2045, %v2043, -inf
    %v2050 = vsel %vm2045, %v2044, -inf
    %v2051 = vmax.f32 %v2046, %v2050
    %v2052 = vmax.f32 %v2051, %v2047
    %v2053 = vmax.f32 %v2048, %v2049
    %v2054 = vmax.f32 %v2052, %v2053
    %2055 = vmax.xlane.f32.xlu0 %v2054
    %v2056 = vpop.xlane.xlu0 %2055
    %v2057 = vrot.slane %v2056, 4
    %v2058 = vmax.f32 %v2056, %v2057
    %v2059 = vrot.slane %v2058, 2
    %v2060 = vmax.f32 %v2058, %v2059
    %v2061 = vrot.slane %v2060, 1
    %v2062 = vmax.f32 %v2060, %v2061
    %s2063 = vtos %v2062
    %v2064 = vstv %s2063
    %v2065 = vsub.f32 %v2040, %v2064
    %v2066 = vsub.f32 %v2041, %v2064
    %v2067 = vsub.f32 %v2042, %v2064
    %v2068 = vsub.f32 %v2043, %v2064
    %v2069 = vsub.f32 %v2044, %v2064
    %v2070 = vmul.f32 %v2065, 1.442695
    %v2071 = vpow.pop %v2070
    %v2072 = vmul.f32 %v2066, 1.442695
    %v2073 = vpow.pop %v2072
    %v2074 = vmul.f32 %v2067, 1.442695
    %v2075 = vpow.pop %v2074
    %v2076 = vmul.f32 %v2068, 1.442695
    %v2077 = vpow.pop %v2076
    %v2078 = vmul.f32 %v2069, 1.442695
    %v2079 = vpow.pop %v2078
    %2085 = vrot.lane.b32.xlu0 %v2071, 104
    %v2086 = vpop.permute.xlu0 %2085
    %2087 = vrot.lane.b32.xlu0 %v2073, 104
    %v2088 = vpop.permute.xlu0 %2087
    %2089 = vrot.lane.b32.xlu0 %v2075, 104
    %v2090 = vpop.permute.xlu0 %2089
    %2091 = vrot.lane.b32.xlu0 %v2077, 104
    %v2092 = vpop.permute.xlu0 %2091
    %2093 = vrot.lane.b32.xlu0 %v2079, 104
    %v2094 = vpop.permute.xlu0 %2093
    %2100 = vmatprep.subr.mxu0 0.0
    %2101 = vmatpush1.msra.mxu0 %v2086
    %2102 = vmatprep.subr.mxu0 0.0
    %2103 = vmatpush1.msra.mxu0 %v2088
    %2104 = vmatprep.subr.mxu0 0.0
    %2105 = vmatpush1.msra.mxu0 %v2090
    %2106 = vmatprep.subr.mxu0 0.0
    %2107 = vmatpush1.msra.mxu0 %v2092
    %2108 = vmatprep.subr.mxu0 0.0
    %2109 = vmatpush1.msra.mxu0 %v2094
    %2110 = vmatprep.subr.mxu0 0.0
    %2111 = vmatpush1.msra.mxu0 0.0
    %2112 = vmatprep.subr.mxu0 0.0
    %2113 = vmatpush1.msra.mxu0 0.0
    %2114 = vmatprep.subr.mxu0 0.0
    %2115 = vmatpush1.msra.mxu0 0.0
    %2116 = vmatprep.subr.mxu0 0.0
    %2117 = vmatpush1.msra.mxu0 0.0
    %2118 = vmatprep.subr.mxu0 0.0
    %2119 = vmatpush1.msra.mxu0 0.0
    %2120 = vmatprep.subr.mxu0 0.0
    %2121 = vmatpush1.msra.mxu0 0.0
    %2122 = vmatprep.subr.mxu0 0.0
    %2123 = vmatpush1.msra.mxu0 0.0
    %2124 = vmatprep.subr.mxu0 0.0
    %2125 = vmatpush1.msra.mxu0 0.0
    %2126 = vmatprep.subr.mxu0 0.0
    %2127 = vmatpush1.msra.mxu0 0.0
    %2128 = vmatprep.subr.mxu0 0.0
    %2129 = vmatpush1.msra.mxu0 0.0
    %2130 = vmatprep.subr.mxu0 0.0
    %2131 = vmatpush1.msra.mxu0 0.0
    %2132 = vmatprep.subr.mxu0 0.0
    %2133 = vmatpush1.msra.mxu0 0.0
    %2134 = vmatprep.subr.mxu0 0.0
    %2135 = vmatpush1.msra.mxu0 0.0
    %2136 = vmatprep.subr.mxu0 0.0
    %2137 = vmatpush1.msra.mxu0 0.0
    %2138 = vmatprep.subr.mxu0 0.0
    %2139 = vmatpush1.msra.mxu0 0.0
    %2140 = vmatprep.subr.mxu0 0.0
    %2141 = vmatpush1.msra.mxu0 0.0
    %2142 = vmatprep.subr.mxu0 0.0
    %2143 = vmatpush1.msra.mxu0 0.0
    %2144 = vmatprep.subr.mxu0 0.0
    %2145 = vmatpush1.msra.mxu0 0.0
    %2146 = vmatprep.subr.mxu0 0.0
    %2147 = vmatpush1.msra.mxu0 0.0
    %2148 = vmatprep.subr.mxu0 0.0
    %2149 = vmatpush1.msra.mxu0 0.0
    %2150 = vmatprep.subr.mxu0 0.0
    %2151 = vmatpush1.msra.mxu0 0.0
    %2152 = vmatprep.subr.mxu0 0.0
    %2153 = vmatpush1.msra.mxu0 0.0
    %2154 = vmatprep.subr.mxu0 0.0
    %2155 = vmatpush1.msra.mxu0 0.0
    %2156 = vmatprep.subr.mxu0 0.0
    %2157 = vmatpush1.msra.mxu0 0.0
    %2158 = vmatprep.subr.mxu0 0.0
    %2159 = vmatpush1.msra.mxu0 0.0
    %2160 = vmatprep.subr.mxu0 0.0
    %2161 = vmatpush1.msra.mxu0 0.0
    %2162 = vmatprep.subr.mxu0 0.0
    %2163 = vmatpush1.msra.mxu0 0.0
    %2164 = vmatprep.mubr.f32.mxu0 0.0
    %2165 = vmatmul.mubr.f32.gmra.mrb[0].mxu0 %v504
    %v2166 = vpop.f32.mrb[0].mxu0
    %v2167 = vadd.f32 0.0, %v2166
    %v2168 = vpop.f32.mrb[0].mxu0
    %2169 = vmatprep.mubr.f32.mxu0 0.0
    %2170 = vmatmul.mubr.f32.gmra.mrb[0].mxu0 %v507
    %v2171 = vpop.f32.mrb[0].mxu0
    %v2172 = vadd.f32 0.0, %v2171
    %v2173 = vpop.f32.mrb[0].mxu0
    %2174 = vdwg.mxu0
    %v2176 = vsel %vm168, %v2172, 0
    %2178 = vmatprep.subr.mxu0 0.0
    %2179 = vmatpush1.msra.mxu0 %v2167
    %2180 = vmatprep.subr.mxu0 0.0
    %2181 = vmatpush1.msra.mxu0 %v2176
    %2182 = vmatprep.subr.mxu0 0.0
    %2183 = vmatpush1.msra.mxu0 0.0
    %2184 = vmatprep.subr.mxu0 0.0
    %2185 = vmatpush1.msra.mxu0 0.0
    %2186 = vmatprep.subr.mxu0 0.0
    %2187 = vmatpush1.msra.mxu0 0.0
    %2188 = vmatprep.subr.mxu0 0.0
    %2189 = vmatpush1.msra.mxu0 0.0
    %2190 = vmatprep.subr.mxu0 0.0
    %2191 = vmatpush1.msra.mxu0 0.0
    %2192 = vmatprep.subr.mxu0 0.0
    %2193 = vmatpush1.msra.mxu0 0.0
    %2194 = vmatprep.subr.mxu0 0.0
    %2195 = vmatpush1.msra.mxu0 0.0
    %2196 = vmatprep.subr.mxu0 0.0
    %2197 = vmatpush1.msra.mxu0 0.0
    %2198 = vmatprep.subr.mxu0 0.0
    %2199 = vmatpush1.msra.mxu0 0.0
    %2200 = vmatprep.subr.mxu0 0.0
    %2201 = vmatpush1.msra.mxu0 0.0
    %2202 = vmatprep.subr.mxu0 0.0
    %2203 = vmatpush1.msra.mxu0 0.0
    %2204 = vmatprep.subr.mxu0 0.0
    %2205 = vmatpush1.msra.mxu0 0.0
    %2206 = vmatprep.subr.mxu0 0.0
    %2207 = vmatpush1.msra.mxu0 0.0
    %2208 = vmatprep.subr.mxu0 0.0
    %2209 = vmatpush1.msra.mxu0 0.0
    %2210 = vmatprep.subr.mxu0 0.0
    %2211 = vmatpush1.msra.mxu0 0.0
    %2212 = vmatprep.subr.mxu0 0.0
    %2213 = vmatpush1.msra.mxu0 0.0
    %2214 = vmatprep.subr.mxu0 0.0
    %2215 = vmatpush1.msra.mxu0 0.0
    %2216 = vmatprep.subr.mxu0 0.0
    %2217 = vmatpush1.msra.mxu0 0.0
    %2218 = vmatprep.subr.mxu0 0.0
    %2219 = vmatpush1.msra.mxu0 0.0
    %2220 = vmatprep.subr.mxu0 0.0
    %2221 = vmatpush1.msra.mxu0 0.0
    %2222 = vmatprep.subr.mxu0 0.0
    %2223 = vmatpush1.msra.mxu0 0.0
    %2224 = vmatprep.subr.mxu0 0.0
    %2225 = vmatpush1.msra.mxu0 0.0
    %2226 = vmatprep.subr.mxu0 0.0
    %2227 = vmatpush1.msra.mxu0 0.0
    %2228 = vmatprep.subr.mxu0 0.0
    %2229 = vmatpush1.msra.mxu0 0.0
    %2230 = vmatprep.subr.mxu0 0.0
    %2231 = vmatpush1.msra.mxu0 0.0
    %2232 = vmatprep.subr.mxu0 0.0
    %2233 = vmatpush1.msra.mxu0 0.0
    %2234 = vmatprep.subr.mxu0 0.0
    %2235 = vmatpush1.msra.mxu0 0.0
    %2236 = vmatprep.subr.mxu0 0.0
    %2237 = vmatpush1.msra.mxu0 0.0
    %2238 = vmatprep.subr.mxu0 0.0
    %2239 = vmatpush1.msra.mxu0 0.0
    %2240 = vmatprep.subr.mxu0 0.0
    %2241 = vmatpush1.msra.mxu0 0.0
    %2242 = vmatprep.mubr.f32.mxu0 0.0
    %2243 = vmatmul.mubr.f32.gmra.mrb[0].mxu0 %v269
    %v2244 = vpop.f32.mrb[0].mxu0
    %v2245 = vadd.f32 1e-16, %v2244
    %v2246 = vpop.f32.mrb[0].mxu0
    %2247 = vmatprep.mubr.f32.mxu0 0.0
    %2248 = vmatmul.mubr.f32.gmra.mrb[0].mxu0 %v272
    %v2249 = vpop.f32.mrb[0].mxu0
    %v2250 = vadd.f32 1e-16, %v2249
    %v2251 = vpop.f32.mrb[0].mxu0
    %2252 = vmatprep.mubr.f32.mxu0 0.0
    %2253 = vmatmul.mubr.f32.gmra.mrb[0].mxu0 %v275
    %v2254 = vpop.f32.mrb[0].mxu0
    %v2255 = vadd.f32 1e-16, %v2254
    %v2256 = vpop.f32.mrb[0].mxu0
    %2257 = vmatprep.mubr.f32.mxu0 0.0
    %2258 = vmatmul.mubr.f32.gmra.mrb[0].mxu0 %v278
    %v2259 = vpop.f32.mrb[0].mxu0
    %v2260 = vadd.f32 1e-16, %v2259
    %v2261 = vpop.f32.mrb[0].mxu0
    %2262 = vmatprep.mubr.f32.mxu0 0.0
    %2263 = vmatmul.mubr.f32.gmra.mrb[0].mxu0 %v281
    %v2264 = vpop.f32.mrb[0].mxu0
    %v2265 = vadd.f32 1e-16, %v2264
    %v2266 = vpop.f32.mrb[0].mxu0
    %2267 = vdwg.mxu0
    %v2268 = vrcp.pop %v2245
    %v2269 = vrcp.pop %v2250
    %v2270 = vrcp.pop %v2255
    %v2271 = vrcp.pop %v2260
    %v2272 = vrcp.pop %v2265
    %2278 = vrot.lane.b32.xlu0 %v2268, 24
    %v2279 = vpop.permute.xlu0 %2278
    %2280 = vrot.lane.b32.xlu0 %v2269, 24
    %v2281 = vpop.permute.xlu0 %2280
    %2282 = vrot.lane.b32.xlu0 %v2270, 24
    %v2283 = vpop.permute.xlu0 %2282
    %2284 = vrot.lane.b32.xlu0 %v2271, 24
    %v2285 = vpop.permute.xlu0 %2284
    %2286 = vrot.lane.b32.xlu0 %v2272, 24
    %v2287 = vpop.permute.xlu0 %2286
    %v2293 = vmul.f32 %v2071, %v2279
    %v2294 = vmul.f32 %v2073, %v2281
    %v2295 = vmul.f32 %v2075, %v2283
    %v2296 = vmul.f32 %v2077, %v2285
    %v2297 = vmul.f32 %v2079, %v2287
    %2303 = vrot.lane.b32.xlu0 %v2293, 104
    %v2304 = vpop.permute.xlu0 %2303
    %2305 = vrot.lane.b32.xlu0 %v2294, 104
    %v2306 = vpop.permute.xlu0 %2305
    %2307 = vrot.lane.b32.xlu0 %v2295, 104
    %v2308 = vpop.permute.xlu0 %2307
    %2309 = vrot.lane.b32.xlu0 %v2296, 104
    %v2310 = vpop.permute.xlu0 %2309
    %2311 = vrot.lane.b32.xlu0 %v2297, 104
    %v2312 = vpop.permute.xlu0 %2311
    %v2313 = vsel %vm722, %v2304, 0
    %v2315 = vsel %vm722, %v2306, 0
    %v2317 = vsel %vm722, %v2308, 0
    %v2319 = vsel %vm722, %v2310, 0
    %v2321 = vsel %vm722, %v2312, 0
    %v2324 = vsel %vm733, %v1727, 0
    %2326 = vmatprep.subr.mxu0 0.0
    %2327 = vmatpush1.msra.mxu0 %v2324
    %2328 = vmatprep.subr.mxu0 0.0
    %2329 = vmatpush1.msra.mxu0 0.0
    %2330 = vmatprep.subr.mxu0 0.0
    %2331 = vmatpush1.msra.mxu0 0.0
    %2332 = vmatprep.subr.mxu0 0.0
    %2333 = vmatpush1.msra.mxu0 0.0
    %2334 = vmatprep.subr.mxu0 0.0
    %2335 = vmatpush1.msra.mxu0 0.0
    %2336 = vmatprep.subr.mxu0 0.0
    %2337 = vmatpush1.msra.mxu0 0.0
    %2338 = vmatprep.subr.mxu0 0.0
    %2339 = vmatpush1.msra.mxu0 0.0
    %2340 = vmatprep.subr.mxu0 0.0
    %2341 = vmatpush1.msra.mxu0 0.0
    %2342 = vmatprep.subr.mxu0 0.0
    %2343 = vmatpush1.msra.mxu0 0.0
    %2344 = vmatprep.subr.mxu0 0.0
    %2345 = vmatpush1.msra.mxu0 0.0
    %2346 = vmatprep.subr.mxu0 0.0
    %2347 = vmatpush1.msra.mxu0 0.0
    %2348 = vmatprep.subr.mxu0 0.0
    %2349 = vmatpush1.msra.mxu0 0.0
    %2350 = vmatprep.subr.mxu0 0.0
    %2351 = vmatpush1.msra.mxu0 0.0
    %2352 = vmatprep.subr.mxu0 0.0
    %2353 = vmatpush1.msra.mxu0 0.0
    %2354 = vmatprep.subr.mxu0 0.0
    %2355 = vmatpush1.msra.mxu0 0.0
    %2356 = vmatprep.subr.mxu0 0.0
    %2357 = vmatpush1.msra.mxu0 0.0
    %2358 = vmatprep.subr.mxu0 0.0
    %2359 = vmatpush1.msra.mxu0 0.0
    %2360 = vmatprep.subr.mxu0 0.0
    %2361 = vmatpush1.msra.mxu0 0.0
    %2362 = vmatprep.subr.mxu0 0.0
    %2363 = vmatpush1.msra.mxu0 0.0
    %2364 = vmatprep.subr.mxu0 0.0
    %2365 = vmatpush1.msra.mxu0 0.0
    %2366 = vmatprep.subr.mxu0 0.0
    %2367 = vmatpush1.msra.mxu0 0.0
    %2368 = vmatprep.subr.mxu0 0.0
    %2369 = vmatpush1.msra.mxu0 0.0
    %2370 = vmatprep.subr.mxu0 0.0
    %2371 = vmatpush1.msra.mxu0 0.0
    %2372 = vmatprep.subr.mxu0 0.0
    %2373 = vmatpush1.msra.mxu0 0.0
    %2374 = vmatprep.subr.mxu0 0.0
    %2375 = vmatpush1.msra.mxu0 0.0
    %2376 = vmatprep.subr.mxu0 0.0
    %2377 = vmatpush1.msra.mxu0 0.0
    %2378 = vmatprep.subr.mxu0 0.0
    %2379 = vmatpush1.msra.mxu0 0.0
    %2380 = vmatprep.subr.mxu0 0.0
    %2381 = vmatpush1.msra.mxu0 0.0
    %2382 = vmatprep.subr.mxu0 0.0
    %2383 = vmatpush1.msra.mxu0 0.0
    %2384 = vmatprep.subr.mxu0 0.0
    %2385 = vmatpush1.msra.mxu0 0.0
    %2386 = vmatprep.subr.mxu0 0.0
    %2387 = vmatpush1.msra.mxu0 0.0
    %2388 = vmatprep.subr.mxu0 0.0
    %2389 = vmatpush1.msra.mxu0 0.0
    %2390 = vmatprep.mubr.f32.mxu0 0.0
    %2391 = vmatmul.mubr.f32.gmra.mrb[0].mxu0 %v2313
    %v2392 = vpop.f32.mrb[0].mxu0
    %v2393 = vadd.f32 0.0, %v2392
    %v2394 = vpop.f32.mrb[0].mxu0
    %2395 = vmatprep.mubr.f32.mxu0 0.0
    %2396 = vmatmul.mubr.f32.gmra.mrb[0].mxu0 %v2315
    %v2397 = vpop.f32.mrb[0].mxu0
    %v2398 = vadd.f32 0.0, %v2397
    %v2399 = vpop.f32.mrb[0].mxu0
    %2400 = vmatprep.mubr.f32.mxu0 0.0
    %2401 = vmatmul.mubr.f32.gmra.mrb[0].mxu0 %v2317
    %v2402 = vpop.f32.mrb[0].mxu0
    %v2403 = vadd.f32 0.0, %v2402
    %v2404 = vpop.f32.mrb[0].mxu0
    %2405 = vmatprep.mubr.f32.mxu0 0.0
    %2406 = vmatmul.mubr.f32.gmra.mrb[0].mxu0 %v2319
    %v2407 = vpop.f32.mrb[0].mxu0
    %v2408 = vadd.f32 0.0, %v2407
    %v2409 = vpop.f32.mrb[0].mxu0
    %2410 = vmatprep.mubr.f32.mxu0 0.0
    %2411 = vmatmul.mubr.f32.gmra.mrb[0].mxu0 %v2321
    %v2412 = vpop.f32.mrb[0].mxu0
    %v2413 = vadd.f32 0.0, %v2412
    %v2414 = vpop.f32.mrb[0].mxu0
    %2415 = vdwg.mxu0
    %v2416 = vmul.f32 %v1884, %v2393
    %v2417 = vmul.f32 %v1889, %v2398
    %v2418 = vmul.f32 %v1894, %v2403
    %v2419 = vmul.f32 %v1899, %v2408
    %v2420 = vmul.f32 %v1904, %v2413
    %2421 = vrot.lane.b32.xlu0 %v1806, 100
    %v2422 = vpop.permute.xlu0 %2421
    %2423 = vrot.lane.b32.xlu0 %v1811, 100
    %v2424 = vpop.permute.xlu0 %2423
    %2427 = vmatprep.subr.mxu0 0.0
    %2428 = vmatpush1.msra.mxu0 %v2416
    %2429 = vmatprep.subr.mxu0 0.0
    %2430 = vmatpush1.msra.mxu0 %v2417
    %2431 = vmatprep.subr.mxu0 0.0
    %2432 = vmatpush1.msra.mxu0 %v2418
    %2433 = vmatprep.subr.mxu0 0.0
    %2434 = vmatpush1.msra.mxu0 %v2419
    %2435 = vmatprep.subr.mxu0 0.0
    %2436 = vmatpush1.msra.mxu0 %v2420
    %2437 = vmatprep.subr.mxu0 0.0
    %2438 = vmatpush1.msra.mxu0 0.0
    %2439 = vmatprep.subr.mxu0 0.0
    %2440 = vmatpush1.msra.mxu0 0.0
    %2441 = vmatprep.subr.mxu0 0.0
    %2442 = vmatpush1.msra.mxu0 0.0
    %2443 = vmatprep.subr.mxu0 0.0
    %2444 = vmatpush1.msra.mxu0 0.0
    %2445 = vmatprep.subr.mxu0 0.0
    %2446 = vmatpush1.msra.mxu0 0.0
    %2447 = vmatprep.subr.mxu0 0.0
    %2448 = vmatpush1.msra.mxu0 0.0
    %2449 = vmatprep.subr.mxu0 0.0
    %2450 = vmatpush1.msra.mxu0 0.0
    %2451 = vmatprep.subr.mxu0 0.0
    %2452 = vmatpush1.msra.mxu0 0.0
    %2453 = vmatprep.subr.mxu0 0.0
    %2454 = vmatpush1.msra.mxu0 0.0
    %2455 = vmatprep.subr.mxu0 0.0
    %2456 = vmatpush1.msra.mxu0 0.0
    %2457 = vmatprep.subr.mxu0 0.0
    %2458 = vmatpush1.msra.mxu0 0.0
    %2459 = vmatprep.subr.mxu0 0.0
    %2460 = vmatpush1.msra.mxu0 0.0
    %2461 = vmatprep.subr.mxu0 0.0
    %2462 = vmatpush1.msra.mxu0 0.0
    %2463 = vmatprep.subr.mxu0 0.0
    %2464 = vmatpush1.msra.mxu0 0.0
    %2465 = vmatprep.subr.mxu0 0.0
    %2466 = vmatpush1.msra.mxu0 0.0
    %2467 = vmatprep.subr.mxu0 0.0
    %2468 = vmatpush1.msra.mxu0 0.0
    %2469 = vmatprep.subr.mxu0 0.0
    %2470 = vmatpush1.msra.mxu0 0.0
    %2471 = vmatprep.subr.mxu0 0.0
    %2472 = vmatpush1.msra.mxu0 0.0
    %2473 = vmatprep.subr.mxu0 0.0
    %2474 = vmatpush1.msra.mxu0 0.0
    %2475 = vmatprep.subr.mxu0 0.0
    %2476 = vmatpush1.msra.mxu0 0.0
    %2477 = vmatprep.subr.mxu0 0.0
    %2478 = vmatpush1.msra.mxu0 0.0
    %2479 = vmatprep.subr.mxu0 0.0
    %2480 = vmatpush1.msra.mxu0 0.0
    %2481 = vmatprep.subr.mxu0 0.0
    %2482 = vmatpush1.msra.mxu0 0.0
    %2483 = vmatprep.subr.mxu0 0.0
    %2484 = vmatpush1.msra.mxu0 0.0
    %2485 = vmatprep.subr.mxu0 0.0
    %2486 = vmatpush1.msra.mxu0 0.0
    %2487 = vmatprep.subr.mxu0 0.0
    %2488 = vmatpush1.msra.mxu0 0.0
    %2489 = vmatprep.subr.mxu0 0.0
    %2490 = vmatpush1.msra.mxu0 0.0
    %2491 = vmatprep.mubr.f32.mxu0 0.0
    %2492 = vmatmul.mubr.f32.gmra.mrb[0].mxu0 %v504
    %v2493 = vpop.f32.mrb[0].mxu0
    %v2494 = vadd.f32 %v2422, %v2493
    %v2495 = vpop.f32.mrb[0].mxu0
    %2496 = vmatprep.mubr.f32.mxu0 0.0
    %2497 = vmatmul.mubr.f32.gmra.mrb[0].mxu0 %v507
    %v2498 = vpop.f32.mrb[0].mxu0
    %v2499 = vadd.f32 %v2424, %v2498
    %v2500 = vpop.f32.mrb[0].mxu0
    %2501 = vdwg.mxu0
    %v2503 = vlaneseq
    %v2504 = vshrl.u32 %v2503, 7
    %v2505 = vsub.s32 0, %v2504
    %v2506 = vrot.slane %v1728, %v2505
    %vm2508 = vcmask 195584
    %v2510 = vsel %vm2508, %v2494, 0
    %v2513 = vsel %vm2508, %v2499, 0
    %2515 = vmatprep.subr.mxu0 0.0
    %2516 = vmatpush1.msra.mxu0 %v1729
    %2517 = vmatprep.subr.mxu0 0.0
    %2518 = vmatpush1.msra.mxu0 %v1730
    %2519 = vmatprep.subr.mxu0 0.0
    %2520 = vmatpush1.msra.mxu0 %v1731
    %2521 = vmatprep.subr.mxu0 0.0
    %2522 = vmatpush1.msra.mxu0 0.0
    %2523 = vmatprep.subr.mxu0 0.0
    %2524 = vmatpush1.msra.mxu0 0.0
    %2525 = vmatprep.subr.mxu0 0.0
    %2526 = vmatpush1.msra.mxu0 0.0
    %2527 = vmatprep.subr.mxu0 0.0
    %2528 = vmatpush1.msra.mxu0 0.0
    %2529 = vmatprep.subr.mxu0 0.0
    %2530 = vmatpush1.msra.mxu0 0.0
    %2531 = vmatprep.subr.mxu0 0.0
    %2532 = vmatpush1.msra.mxu0 0.0
    %2533 = vmatprep.subr.mxu0 0.0
    %2534 = vmatpush1.msra.mxu0 0.0
    %2535 = vmatprep.subr.mxu0 0.0
    %2536 = vmatpush1.msra.mxu0 0.0
    %2537 = vmatprep.subr.mxu0 0.0
    %2538 = vmatpush1.msra.mxu0 0.0
    %2539 = vmatprep.subr.mxu0 0.0
    %2540 = vmatpush1.msra.mxu0 0.0
    %2541 = vmatprep.subr.mxu0 0.0
    %2542 = vmatpush1.msra.mxu0 0.0
    %2543 = vmatprep.subr.mxu0 0.0
    %2544 = vmatpush1.msra.mxu0 0.0
    %2545 = vmatprep.subr.mxu0 0.0
    %2546 = vmatpush1.msra.mxu0 0.0
    %2547 = vmatprep.subr.mxu0 0.0
    %2548 = vmatpush1.msra.mxu0 0.0
    %2549 = vmatprep.subr.mxu0 0.0
    %2550 = vmatpush1.msra.mxu0 0.0
    %2551 = vmatprep.subr.mxu0 0.0
    %2552 = vmatpush1.msra.mxu0 0.0
    %2553 = vmatprep.subr.mxu0 0.0
    %2554 = vmatpush1.msra.mxu0 0.0
    %2555 = vmatprep.subr.mxu0 0.0
    %2556 = vmatpush1.msra.mxu0 0.0
    %2557 = vmatprep.subr.mxu0 0.0
    %2558 = vmatpush1.msra.mxu0 0.0
    %2559 = vmatprep.subr.mxu0 0.0
    %2560 = vmatpush1.msra.mxu0 0.0
    %2561 = vmatprep.subr.mxu0 0.0
    %2562 = vmatpush1.msra.mxu0 0.0
    %2563 = vmatprep.subr.mxu0 0.0
    %2564 = vmatpush1.msra.mxu0 0.0
    %2565 = vmatprep.subr.mxu0 0.0
    %2566 = vmatpush1.msra.mxu0 0.0
    %2567 = vmatprep.subr.mxu0 0.0
    %2568 = vmatpush1.msra.mxu0 0.0
    %2569 = vmatprep.subr.mxu0 0.0
    %2570 = vmatpush1.msra.mxu0 0.0
    %2571 = vmatprep.subr.mxu0 0.0
    %2572 = vmatpush1.msra.mxu0 0.0
    %2573 = vmatprep.subr.mxu0 0.0
    %2574 = vmatpush1.msra.mxu0 0.0
    %2575 = vmatprep.subr.mxu0 0.0
    %2576 = vmatpush1.msra.mxu0 0.0
    %2577 = vmatprep.subr.mxu0 0.0
    %2578 = vmatpush1.msra.mxu0 0.0
    %2579 = vmatprep.mubr.f32.mxu0 0.0
    %2580 = vmatmul.mubr.f32.gmra.mrb[0].mxu0 %v2510
    %v2581 = vpop.f32.mrb[0].mxu0
    %v2582 = vadd.f32 %v2506, %v2581
    %v2583 = vpop.f32.mrb[0].mxu0
    %2584 = vmatprep.mubr.f32.mxu0 0.0
    %2585 = vmatmul.mubr.f32.gmra.mrb[0].mxu0 %v2513
    %v2586 = vpop.f32.mrb[0].mxu0
    %v2587 = vadd.f32 %v2506, %v2586
    %v2588 = vpop.f32.mrb[0].mxu0
    %2589 = vdwg.mxu0
    %2590 = vst.msk [vmem:[#allocation2] sm:$0xff] %vm152, %v2582
    %vm2591 = vcmask 93184
    %2592 = vst.msk [vmem:[#allocation2 + $0x8] sm:$0xf] %vm2591, %v2587
    // Predicated region
    $region54: #{tpu_custom_call.1} parent=1 // pred_check
      _
    $region55: #{tpu_custom_call.1} parent=1 // pred_check_branch
      %2594 = sbr.rel (0) target = $region57
    $region56: #{tpu_custom_call.1} parent=1 // pred_region
      %s2596 = ssub.s32 256, 256
      %2597 = vsyncadd [#allocation3], %s2596
      %s2598 = sshll.u32 [#allocation2], 4
      %s2599 = int_to_ptr.vmem [resolvable:$true] %s2598
      %2604 = dma.vmem_to_hbm [thread:$0]  %s2599, 256, %s13, [#allocation3], 128, 128, 8
    $region57: #{tpu_custom_call.1} parent=1 // pred_fallthru
      _
    // Predicated region
    $region58: #{tpu_custom_call.1} parent=1 // pred_check
      _
    $region59: #{tpu_custom_call.1} parent=1 // pred_check_branch
      %2606 = sbr.rel (0) target = $region61
    $region60: #{tpu_custom_call.1} parent=1 // pred_region
      %2607 = dma.done [#allocation3], 256
    $region61: #{tpu_custom_call.1} parent=1 // pred_fallthru
      _
    %2608 = vsyncpa [#allocation3], 1

</llo_original>
